<compile_context>
chip_gen: v5e
topology: v5e:2x2
jax: 0.10.0
libtpu: 0.0.40
codegen_flags: <defaults>
</compile_context>

<pallas_src>
import functools

import jax
import jax.numpy as jnp
from jax.experimental import pallas as pl
from jax.experimental.pallas import tpu as pltpu

EPS = 1e-5                       # nn.BatchNorm2d default eps
_LANE = 128
_VMEM_LIMIT = 32 * 1024 * 1024   # explicit scoped-VMEM limit (safe on v5e/v6e/v7x)
_TILE_BUDGET = 12 * 1024 * 1024  # keep working set well under half the limit


def _round_up(x, m):
    return (x + m - 1) // m * m


def _pick_tm(M, bytes_per_row, fixed_bytes=0):
    """Largest row tile (multiple of 8, divides M) whose double-buffered
    footprint fits the VMEM budget; prefer >=2 grid steps so the pipeline
    actually overlaps DMA and compute."""
    candidates = (2048, 1024, 512, 256, 128, 64, 32, 16, 8)
    fitting = [t for t in candidates
               if M % t == 0 and 2 * t * bytes_per_row + fixed_bytes <= _TILE_BUDGET]
    for t in fitting:
        if M // t >= 2:
            return t
    if fitting:
        return fitting[0]
    return M  # tiny / odd fallback: single full tile


def _compiler_params():
    return pltpu.CompilerParams(
        dimension_semantics=("parallel",),
        vmem_limit_bytes=_VMEM_LIMIT,
    )


# ----------------------------------------------------------------------------
# Pallas kernels
# ----------------------------------------------------------------------------
def _masked_conv_kernel(p_ref, s_ref, w_ref, y_ref, st_ref, *, inv_tm):
    """im2col matmul fused with mask-count scaling + BN partial statistics.

    p_ref  : (TM, K)  bf16 image patches
    s_ref  : (TM, 1)  f32 per-pixel 1/count (0 where count == 0)
    w_ref  : (K, Cp)  bf16 weights (Cout padded to lane width, VMEM-resident)
    y_ref  : (TM, Cp) f32 masked conv output (lane-dense, unmasked vst)
    st_ref : (1, 2, Cp) f32 per-tile [sum; centered M2] for BatchNorm stats
    """
    y = jnp.dot(p_ref[...], w_ref[...], preferred_element_type=jnp.float32)
    y = y * s_ref[...]                              # per-row mask normalization
    y_ref[...] = y
    s = jnp.sum(y, axis=0, keepdims=True)           # (1, Cp)
    mu = s * inv_tm
    d = y - mu
    m2 = jnp.sum(d * d, axis=0, keepdims=True)      # (1, Cp), centered (stable)
    st_ref[...] = jnp.concatenate([s, m2], axis=0)[None]


def _bn_relu_kernel(x_ref, a_ref, b_ref, o_ref):
    """Apply precomputed BN affine (a = gamma*rsqrt(var+eps), b = beta-mean*a) + ReLU."""
    o_ref[...] = jnp.maximum(x_ref[...] * a_ref[...] + b_ref[...], 0.0)


def _bn_add_relu_kernel(x_ref, r_ref, a_ref, b_ref, o_ref):
    """BN affine + residual add + ReLU (tail of a BasicBlock)."""
    o_ref[...] = jnp.maximum(x_ref[...] * a_ref[...] + b_ref[...] + r_ref[...], 0.0)


# ----------------------------------------------------------------------------
# XLA-side helpers (tiny mask path, im2col, stats combine)
# ----------------------------------------------------------------------------
def _mask_count(mask_f, k, pad):
    """Exact count of valid taps per output pixel (stride 1, zero pad)."""
    N, H, W = mask_f.shape
    mp = jnp.pad(mask_f, ((0, 0), (pad, pad), (pad, pad)))
    c = jnp.zeros((N, H, W), jnp.float32)
    for di in range(k):
        for dj in range(k):
            c = c + mp[:, di:di + H, dj:dj + W]
    return c


def _im2col_bf16(x_nhwc, k, pad):
    """Zero-padded stride-1 patch extraction in bf16 (cross-correlation order).

    Casting to bf16 BEFORE the pad/gather halves the intermediate HBM traffic
    of the patch materialization (values are unchanged by pad/slice)."""
    N, H, W, C = x_nhwc.shape
    xp = jnp.pad(x_nhwc.astype(jnp.bfloat16),
                 ((0, 0), (pad, pad), (pad, pad), (0, 0)))
    cols = [xp[:, di:di + H, dj:dj + W, :] for di in range(k) for dj in range(k)]
    p = jnp.concatenate(cols, axis=-1)              # (N, H, W, k*k*C), (di,dj,c) order
    return p.reshape(N * H * W, k * k * C)


def _combine_stats(stats, M, TM):
    """Chan's parallel combination of per-tile (sum, centered M2) -> mean, biased var."""
    sums = stats[:, 0, :]                           # (G, Cp)
    m2s = stats[:, 1, :]
    mean = jnp.sum(sums, axis=0) / float(M)
    tile_mean = sums / float(TM)
    m2 = jnp.sum(m2s, axis=0) + float(TM) * jnp.sum(
        (tile_mean - mean[None, :]) ** 2, axis=0)
    var = m2 / float(M)                             # biased, as BN training mode
    return mean, var


def _bn_affine(mean, var, gamma, beta, Cp):
    cout = gamma.shape[0]
    g = jnp.pad(gamma.astype(jnp.float32), (0, Cp - cout))
    b = jnp.pad(beta.astype(jnp.float32), (0, Cp - cout))
    a = g * jax.lax.rsqrt(var + EPS)
    s = b - mean * a
    return a.reshape(1, Cp), s.reshape(1, Cp)


# ----------------------------------------------------------------------------
# pallas_call wrappers
# ----------------------------------------------------------------------------
def masked_conv(x_nhwc, mask_nhw, w_oikk, *, k, pad):
    """MaskedConv2d (kernel_size>1, stride=1, no bias) + fused BN partial stats.

    Returns (y: (M, Cp) f32, (mean, var): (Cp,), new_mask: (N, H, W) f32)."""
    N, H, W, Cin = x_nhwc.shape
    Cout = w_oikk.shape[0]
    Cp = _round_up(Cout, _LANE)
    K = k * k * Cin
    M = N * H * W

    # Mask path: exact, precomputed on the tiny mask (matches PyTorch round/1/count).
    count = _mask_count(mask_nhw, k, pad)
    new_mask = (count > 0.0).astype(jnp.float32)
    scale = jnp.where(count > 0.0, 1.0 / jnp.maximum(count, 1.0), 0.0)
    scale = scale.reshape(M, 1)

    patches = _im2col_bf16(x_nhwc, k, pad)                         # (M, K) bf16
    wmat = jnp.transpose(w_oikk, (2, 3, 1, 0)).reshape(K, Cout)
    wmat = jnp.pad(wmat, ((0, 0), (0, Cp - Cout))).astype(jnp.bfloat16)

    bytes_per_row = K * 2 + 4 + Cp * 4
    TM = _pick_tm(M, bytes_per_row, fixed_bytes=2 * K * Cp * 2)
    G = M // TM

    kern = functools.partial(_masked_conv_kernel, inv_tm=1.0 / float(TM))
    y, stats = pl.pallas_call(
        kern,
        grid=(G,),
        in_specs=[
            pl.BlockSpec((TM, K), lambda i: (i, 0)),
            pl.BlockSpec((TM, 1), lambda i: (i, 0)),
            pl.BlockSpec((K, Cp), lambda i: (0, 0)),   # weight stays VMEM-resident
        ],
        out_specs=[
            pl.BlockSpec((TM, Cp), lambda i: (i, 0)),      # lane-dense output
            pl.BlockSpec((1, 2, Cp), lambda i: (i, 0, 0)),  # per-tile stats
        ],
        out_shape=[
            jax.ShapeDtypeStruct((M, Cp), jnp.float32),
            jax.ShapeDtypeStruct((G, 2, Cp), jnp.float32),
        ],
        compiler_params=_compiler_params(),
    )(patches, scale, wmat)

    mean, var = _combine_stats(stats, M, TM)
    return y, (mean, var), new_mask


def bn_relu(y_flat, mean, var, gamma, beta):
    M, Cp = y_flat.shape
    a, b = _bn_affine(mean, var, gamma, beta, Cp)
    TM = _pick_tm(M, Cp * 4 * 2)
    G = M // TM
    return pl.pallas_call(
        _bn_relu_kernel,
        grid=(G,),
        in_specs=[
            pl.BlockSpec((TM, Cp), lambda i: (i, 0)),
            pl.BlockSpec((1, Cp), lambda i: (0, 0)),
            pl.BlockSpec((1, Cp), lambda i: (0, 0)),
        ],
        out_specs=pl.BlockSpec((TM, Cp), lambda i: (i, 0)),
        out_shape=jax.ShapeDtypeStruct((M, Cp), jnp.float32),
        compiler_params=_compiler_params(),
    )(y_flat, a, b)


def bn_add_relu(y_flat, res_flat, mean, var, gamma, beta):
    M, Cp = y_flat.shape
    a, b = _bn_affine(mean, var, gamma, beta, Cp)
    TM = _pick_tm(M, Cp * 4 * 3)
    G = M // TM
    return pl.pallas_call(
        _bn_add_relu_kernel,
        grid=(G,),
        in_specs=[
            pl.BlockSpec((TM, Cp), lambda i: (i, 0)),
            pl.BlockSpec((TM, Cp), lambda i: (i, 0)),
            pl.BlockSpec((1, Cp), lambda i: (0, 0)),
            pl.BlockSpec((1, Cp), lambda i: (0, 0)),
        ],
        out_specs=pl.BlockSpec((TM, Cp), lambda i: (i, 0)),
        out_shape=jax.ShapeDtypeStruct((M, Cp), jnp.float32),
        compiler_params=_compiler_params(),
    )(y_flat, res_flat, a, b)


# ----------------------------------------------------------------------------
# Model: BasicBlock + MaskedResNet forward
# ----------------------------------------------------------------------------
def basic_block(act_flat, mask, p, N, H, W, C):
    """BasicBlock, stride=1, no downsample.  act_flat is the channel-padded
    (M, Cp) activation; its real channels are [..., :C]."""
    Cp = act_flat.shape[1]
    identity = act_flat
    x_real = act_flat.reshape(N, H, W, Cp)[..., :C]
    y, (mu, var), mask = masked_conv(x_real, mask, p["conv1_w"], k=3, pad=1)
    out = bn_relu(y, mu, var, p["bn1_g"], p["bn1_b"])
    out_real = out.reshape(N, H, W, Cp)[..., :C]
    y, (mu, var), mask = masked_conv(out_real, mask, p["conv2_w"], k=3, pad=1)
    out = bn_add_relu(y, identity, mu, var, p["bn2_g"], p["bn2_b"])
    return out, mask


def masked_resnet_forward(x_nchw, mask_nchw, params):
    """x: (N, C, H, W) f32; mask: (N, 1, H, W) bool.  Returns (NCHW f32, bool mask)."""
    N, _, H, W = x_nchw.shape
    x = jnp.transpose(x_nchw, (0, 2, 3, 1)).astype(jnp.float32)    # NHWC
    mask = mask_nchw[:, 0].astype(jnp.float32)                     # (N, H, W)

    # stem: 5x5 masked conv, pad=2 -> bn1 -> relu
    y, (mu, var), mask = masked_conv(x, mask, params["conv1_w"], k=5, pad=2)
    act = bn_relu(y, mu, var, params["bn1_g"], params["bn1_b"])    # (M, Cp)
    C = params["conv1_w"].shape[0]

    for layer_name in ("layer1", "layer2", "layer3", "layer4"):
        for blk in params[layer_name]:
            act, mask = basic_block(act, mask, blk, N, H, W, C)

    Cp = act.shape[1]
    x_out = act.reshape(N, H, W, Cp)[..., :C]
    x_out = jnp.transpose(x_out, (0, 3, 1, 2))                     # NCHW
    mask_out = (mask > 0.0)[:, None, :, :]                         # (N, 1, H, W) bool
    return x_out, mask_out


# ----------------------------------------------------------------------------
# Deterministic parameter init (PyTorch-like shapes; BN gamma=1, beta=0)
# ----------------------------------------------------------------------------
def init_params(key, in_channel, hidden_channel, layers):
    assert in_channel == hidden_channel, \
        "MaskedResNet requires in_channel == hidden_channel to be runnable"

    def conv_w(k_, cout, cin, ksz):
        fan_in = cin * ksz * ksz
        bound = 1.0 / jnp.sqrt(float(fan_in))
        return jax.random.uniform(k_, (cout, cin, ksz, ksz), jnp.float32, -bound, bound)

    keys = iter(jax.random.split(key, 64))
    params = {
        "conv1_w": conv_w(next(keys), hidden_channel, in_channel, 5),
        "bn1_g": jnp.ones((hidden_channel,), jnp.float32),
        "bn1_b": jnp.zeros((hidden_channel,), jnp.float32),
    }
    c = hidden_channel
    for li, nblocks in enumerate(layers, start=1):
        blks = []
        for _ in range(nblocks):
            blks.append({
                "conv1_w": conv_w(next(keys), c, c, 3),
                "bn1_g": jnp.ones((c,), jnp.float32),
                "bn1_b": jnp.zeros((c,), jnp.float32),
                "conv2_w": conv_w(next(keys), c, c, 3),
                "bn2_g": jnp.ones((c,), jnp.float32),
                "bn2_b": jnp.zeros((c,), jnp.float32),
            })
        params[f"layer{li}"] = blks
    return params


if __name__ == "__main__":
    key = jax.random.PRNGKey(0)
    kx, km, kp = jax.random.split(key, 3)

    # small shapes: batch=2, in_channel = hidden_channel = 8, spatial 16x16
    N, C, H, W = 2, 8, 16, 16
    in_channel = hidden_channel = C
    layers = [1, 1, 1, 1]          # BasicBlock x 1 per stage

    x = jax.random.normal(kx, (N, C, H, W), jnp.float32)
    mask = jax.random.bernoulli(km, 0.7, (N, 1, H, W))
    params = init_params(kp, in_channel, hidden_channel, layers)

    fwd = jax.jit(masked_resnet_forward)
    y, out_mask = fwd(x, mask, params)
    jax.block_until_ready(y)
    jax.block_until_ready(out_mask)

    assert y.shape == (N, hidden_channel, H, W), y.shape
    assert out_mask.shape == (N, 1, H, W), out_mask.shape
    assert bool(jnp.all(jnp.isfinite(y)))
    print("KERNEL_OK")
</pallas_src>

<mosaic_0001>
module attributes {stable_mosaic.version = 11 : i64} {
  func.func @_masked_conv_kernel(%arg0: i32, %arg1: memref<256x200xbf16, #tpu.memory_space<vmem>>, %arg2: memref<256x1xf32, #tpu.memory_space<vmem>>, %arg3: memref<200x128xbf16, #tpu.memory_space<vmem>>, %arg4: memref<256x128xf32, #tpu.memory_space<vmem>>, %arg5: memref<1x2x128xf32, #tpu.memory_space<vmem>>) attributes {dimension_semantics = [#tpu.dimension_semantics<parallel>], iteration_bounds = array<i64: 2>, scalar_prefetch = 0 : i64, scratch_operands = 0 : i64, tpu.core_type = #tpu.core_type<tc>, window_params = [{transform_indices = @transform_0, window_bounds = array<i64: 256, 200>}, {transform_indices = @transform_1, window_bounds = array<i64: 256, 1>}, {pipeline_mode = #tpu.pipeline_mode<synchronous>, transform_indices = @transform_2, window_bounds = array<i64: 200, 128>}, {transform_indices = @transform_3, window_bounds = array<i64: 256, 128>}, {transform_indices = @transform_4, window_bounds = array<i64: 1, 2, 128>}]} {
    %c0 = arith.constant 0 : index
    %c0_0 = arith.constant 0 : index
    %0 = vector.load %arg1[%c0, %c0_0] : memref<256x200xbf16, #tpu.memory_space<vmem>>, vector<256x200xbf16>
    %c0_1 = arith.constant 0 : index
    %c0_2 = arith.constant 0 : index
    %1 = vector.load %arg3[%c0_1, %c0_2] : memref<200x128xbf16, #tpu.memory_space<vmem>>, vector<200x128xbf16>
    %cst = arith.constant dense<0.000000e+00> : vector<256x128xf32>
    %2 = tpu.matmul %0, %1, %cst {dimension_numbers = #tpu.dot_dimension_numbers<[1], [0], [0], [1], [0, 0, 1, 1], [], []>} : vector<256x200xbf16>, vector<200x128xbf16>, vector<256x128xf32> -> vector<256x128xf32>
    %c0_3 = arith.constant 0 : index
    %c0_4 = arith.constant 0 : index
    %3 = vector.load %arg2[%c0_3, %c0_4] : memref<256x1xf32, #tpu.memory_space<vmem>>, vector<256x1xf32>
    %4 = vector.broadcast %3 : vector<256x1xf32> to vector<256x128xf32>
    %5 = arith.mulf %2, %4 : vector<256x128xf32>
    %c0_5 = arith.constant 0 : index
    %c0_6 = arith.constant 0 : index
    %6 = vector.load %arg4[%c0_5, %c0_6] : memref<256x128xf32, #tpu.memory_space<vmem>>, vector<256x128xf32>
    tpu.vector_store %arg4[%c0_5, %c0_6], %5 {strides = array<i32>} : memref<256x128xf32, #tpu.memory_space<vmem>>, vector<256x128xf32>,
    %cst_7 = arith.constant dense<0.000000e+00> : vector<128xf32>
    %7 = vector.multi_reduction <add>, %5, %cst_7 [0] : vector<256x128xf32> to vector<128xf32>
    %8 = vector.shape_cast %7 : vector<128xf32> to vector<1x128xf32>
    %cst_8 = arith.constant 3.906250e-03 : f32
    %9 = vector.broadcast %cst_8 : f32 to vector<1x128xf32>
    %10 = arith.mulf %8, %9 : vector<1x128xf32>
    %11 = vector.broadcast %10 : vector<1x128xf32> to vector<256x128xf32>
    %12 = arith.subf %5, %11 : vector<256x128xf32>
    %13 = arith.mulf %12, %12 : vector<256x128xf32>
    %cst_9 = arith.constant dense<0.000000e+00> : vector<128xf32>
    %14 = vector.multi_reduction <add>, %13, %cst_9 [0] : vector<256x128xf32> to vector<128xf32>
    %15 = vector.shape_cast %14 : vector<128xf32> to vector<1x128xf32>
    %16 = tpu.concatenate %8, %15 in 0 : vector<1x128xf32>, vector<1x128xf32> -> vector<2x128xf32>
    %17 = vector.shape_cast %16 : vector<2x128xf32> to vector<1x2x128xf32>
    %c0_10 = arith.constant 0 : index
    %c0_11 = arith.constant 0 : index
    %c0_12 = arith.constant 0 : index
    %18 = vector.load %arg5[%c0_10, %c0_11, %c0_12] : memref<1x2x128xf32, #tpu.memory_space<vmem>>, vector<1x2x128xf32>
    tpu.vector_store %arg5[%c0_10, %c0_11, %c0_12], %17 {strides = array<i32>} : memref<1x2x128xf32, #tpu.memory_space<vmem>>, vector<1x2x128xf32>,
    return
  }
  func.func @transform_0(%arg0: i32) -> (i32, i32) {
    %c0_i32 = arith.constant 0 : i32
    %c0_i32_0 = arith.constant 0 : i32
    return %arg0, %c0_i32 : i32, i32
  }
  func.func @transform_1(%arg0: i32) -> (i32, i32) {
    %c0_i32 = arith.constant 0 : i32
    %c0_i32_0 = arith.constant 0 : i32
    return %arg0, %c0_i32 : i32, i32
  }
  func.func @transform_2(%arg0: i32) -> (i32, i32) {
    %c0_i32 = arith.constant 0 : i32
    %c0_i32_0 = arith.constant 0 : i32
    %c0_i32_1 = arith.constant 0 : i32
    return %c0_i32, %c0_i32_0 : i32, i32
  }
  func.func @transform_3(%arg0: i32) -> (i32, i32) {
    %c0_i32 = arith.constant 0 : i32
    %c0_i32_0 = arith.constant 0 : i32
    return %arg0, %c0_i32 : i32, i32
  }
  func.func @transform_4(%arg0: i32) -> (i32, i32, i32) {
    %c0_i32 = arith.constant 0 : i32
    %c0_i32_0 = arith.constant 0 : i32
    %c0_i32_1 = arith.constant 0 : i32
    return %arg0, %c0_i32, %c0_i32_0 : i32, i32, i32
  }
}

module attributes {stable_mosaic.version = 11 : i64} {
  func.func @_bn_relu_kernel(%arg0: i32, %arg1: memref<256x128xf32, #tpu.memory_space<vmem>>, %arg2: memref<1x128xf32, #tpu.memory_space<vmem>>, %arg3: memref<1x128xf32, #tpu.memory_space<vmem>>, %arg4: memref<256x128xf32, #tpu.memory_space<vmem>>) attributes {dimension_semantics = [#tpu.dimension_semantics<parallel>], iteration_bounds = array<i64: 2>, scalar_prefetch = 0 : i64, scratch_operands = 0 : i64, tpu.core_type = #tpu.core_type<tc>, window_params = [{transform_indices = @transform_0, window_bounds = array<i64: 256, 128>}, {pipeline_mode = #tpu.pipeline_mode<synchronous>, transform_indices = @transform_1, window_bounds = array<i64: 1, 128>}, {pipeline_mode = #tpu.pipeline_mode<synchronous>, transform_indices = @transform_2, window_bounds = array<i64: 1, 128>}, {transform_indices = @transform_3, window_bounds = array<i64: 256, 128>}]} {
    %c0 = arith.constant 0 : index
    %c0_0 = arith.constant 0 : index
    %0 = vector.load %arg1[%c0, %c0_0] : memref<256x128xf32, #tpu.memory_space<vmem>>, vector<256x128xf32>
    %c0_1 = arith.constant 0 : index
    %c0_2 = arith.constant 0 : index
    %1 = vector.load %arg2[%c0_1, %c0_2] : memref<1x128xf32, #tpu.memory_space<vmem>>, vector<1x128xf32>
    %2 = vector.broadcast %1 : vector<1x128xf32> to vector<256x128xf32>
    %3 = arith.mulf %0, %2 : vector<256x128xf32>
    %c0_3 = arith.constant 0 : index
    %c0_4 = arith.constant 0 : index
    %4 = vector.load %arg3[%c0_3, %c0_4] : memref<1x128xf32, #tpu.memory_space<vmem>>, vector<1x128xf32>
    %5 = vector.broadcast %4 : vector<1x128xf32> to vector<256x128xf32>
    %6 = arith.addf %3, %5 : vector<256x128xf32>
    %cst = arith.constant 0.000000e+00 : f32
    %7 = vector.broadcast %cst : f32 to vector<256x128xf32>
    %8 = arith.maximumf %6, %7 : vector<256x128xf32>
    %c0_5 = arith.constant 0 : index
    %c0_6 = arith.constant 0 : index
    %9 = vector.load %arg4[%c0_5, %c0_6] : memref<256x128xf32, #tpu.memory_space<vmem>>, vector<256x128xf32>
    tpu.vector_store %arg4[%c0_5, %c0_6], %8 {strides = array<i32>} : memref<256x128xf32, #tpu.memory_space<vmem>>, vector<256x128xf32>,
    return
  }
  func.func @transform_0(%arg0: i32) -> (i32, i32) {
    %c0_i32 = arith.constant 0 : i32
    %c0_i32_0 = arith.constant 0 : i32
    return %arg0, %c0_i32 : i32, i32
  }
  func.func @transform_1(%arg0: i32) -> (i32, i32) {
    %c0_i32 = arith.constant 0 : i32
    %c0_i32_0 = arith.constant 0 : i32
    %c0_i32_1 = arith.constant 0 : i32
    return %c0_i32, %c0_i32_0 : i32, i32
  }
  func.func @transform_2(%arg0: i32) -> (i32, i32) {
    %c0_i32 = arith.constant 0 : i32
    %c0_i32_0 = arith.constant 0 : i32
    %c0_i32_1 = arith.constant 0 : i32
    return %c0_i32, %c0_i32_0 : i32, i32
  }
  func.func @transform_3(%arg0: i32) -> (i32, i32) {
    %c0_i32 = arith.constant 0 : i32
    %c0_i32_0 = arith.constant 0 : i32
    return %arg0, %c0_i32 : i32, i32
  }
}

module attributes {stable_mosaic.version = 11 : i64} {
  func.func @_masked_conv_kernel(%arg0: i32, %arg1: memref<256x72xbf16, #tpu.memory_space<vmem>>, %arg2: memref<256x1xf32, #tpu.memory_space<vmem>>, %arg3: memref<72x128xbf16, #tpu.memory_space<vmem>>, %arg4: memref<256x128xf32, #tpu.memory_space<vmem>>, %arg5: memref<1x2x128xf32, #tpu.memory_space<vmem>>) attributes {dimension_semantics = [#tpu.dimension_semantics<parallel>], iteration_bounds = array<i64: 2>, scalar_prefetch = 0 : i64, scratch_operands = 0 : i64, tpu.core_type = #tpu.core_type<tc>, window_params = [{transform_indices = @transform_0, window_bounds = array<i64: 256, 72>}, {transform_indices = @transform_1, window_bounds = array<i64: 256, 1>}, {pipeline_mode = #tpu.pipeline_mode<synchronous>, transform_indices = @transform_2, window_bounds = array<i64: 72, 128>}, {transform_indices = @transform_3, window_bounds = array<i64: 256, 128>}, {transform_indices = @transform_4, window_bounds = array<i64: 1, 2, 128>}]} {
    %c0 = arith.constant 0 : index
    %c0_0 = arith.constant 0 : index
    %0 = vector.load %arg1[%c0, %c0_0] : memref<256x72xbf16, #tpu.memory_space<vmem>>, vector<256x72xbf16>
    %c0_1 = arith.constant 0 : index
    %c0_2 = arith.constant 0 : index
    %1 = vector.load %arg3[%c0_1, %c0_2] : memref<72x128xbf16, #tpu.memory_space<vmem>>, vector<72x128xbf16>
    %cst = arith.constant dense<0.000000e+00> : vector<256x128xf32>
    %2 = tpu.matmul %0, %1, %cst {dimension_numbers = #tpu.dot_dimension_numbers<[1], [0], [0], [1], [0, 0, 1, 1], [], []>} : vector<256x72xbf16>, vector<72x128xbf16>, vector<256x128xf32> -> vector<256x128xf32>
    %c0_3 = arith.constant 0 : index
    %c0_4 = arith.constant 0 : index
    %3 = vector.load %arg2[%c0_3, %c0_4] : memref<256x1xf32, #tpu.memory_space<vmem>>, vector<256x1xf32>
    %4 = vector.broadcast %3 : vector<256x1xf32> to vector<256x128xf32>
    %5 = arith.mulf %2, %4 : vector<256x128xf32>
    %c0_5 = arith.constant 0 : index
    %c0_6 = arith.constant 0 : index
    %6 = vector.load %arg4[%c0_5, %c0_6] : memref<256x128xf32, #tpu.memory_space<vmem>>, vector<256x128xf32>
    tpu.vector_store %arg4[%c0_5, %c0_6], %5 {strides = array<i32>} : memref<256x128xf32, #tpu.memory_space<vmem>>, vector<256x128xf32>,
    %cst_7 = arith.constant dense<0.000000e+00> : vector<128xf32>
    %7 = vector.multi_reduction <add>, %5, %cst_7 [0] : vector<256x128xf32> to vector<128xf32>
    %8 = vector.shape_cast %7 : vector<128xf32> to vector<1x128xf32>
    %cst_8 = arith.constant 3.906250e-03 : f32
    %9 = vector.broadcast %cst_8 : f32 to vector<1x128xf32>
    %10 = arith.mulf %8, %9 : vector<1x128xf32>
    %11 = vector.broadcast %10 : vector<1x128xf32> to vector<256x128xf32>
    %12 = arith.subf %5, %11 : vector<256x128xf32>
    %13 = arith.mulf %12, %12 : vector<256x128xf32>
    %cst_9 = arith.constant dense<0.000000e+00> : vector<128xf32>
    %14 = vector.multi_reduction <add>, %13, %cst_9 [0] : vector<256x128xf32> to vector<128xf32>
    %15 = vector.shape_cast %14 : vector<128xf32> to vector<1x128xf32>
    %16 = tpu.concatenate %8, %15 in 0 : vector<1x128xf32>, vector<1x128xf32> -> vector<2x128xf32>
    %17 = vector.shape_cast %16 : vector<2x128xf32> to vector<1x2x128xf32>
    %c0_10 = arith.constant 0 : index
    %c0_11 = arith.constant 0 : index
    %c0_12 = arith.constant 0 : index
    %18 = vector.load %arg5[%c0_10, %c0_11, %c0_12] : memref<1x2x128xf32, #tpu.memory_space<vmem>>, vector<1x2x128xf32>
    tpu.vector_store %arg5[%c0_10, %c0_11, %c0_12], %17 {strides = array<i32>} : memref<1x2x128xf32, #tpu.memory_space<vmem>>, vector<1x2x128xf32>,
    return
  }
  func.func @transform_0(%arg0: i32) -> (i32, i32) {
    %c0_i32 = arith.constant 0 : i32
    %c0_i32_0 = arith.constant 0 : i32
    return %arg0, %c0_i32 : i32, i32
  }
  func.func @transform_1(%arg0: i32) -> (i32, i32) {
    %c0_i32 = arith.constant 0 : i32
    %c0_i32_0 = arith.constant 0 : i32
    return %arg0, %c0_i32 : i32, i32
  }
  func.func @transform_2(%arg0: i32) -> (i32, i32) {
    %c0_i32 = arith.constant 0 : i32
    %c0_i32_0 = arith.constant 0 : i32
    %c0_i32_1 = arith.constant 0 : i32
    return %c0_i32, %c0_i32_0 : i32, i32
  }
  func.func @transform_3(%arg0: i32) -> (i32, i32) {
    %c0_i32 = arith.constant 0 : i32
    %c0_i32_0 = arith.constant 0 : i32
    return %arg0, %c0_i32 : i32, i32
  }
  func.func @transform_4(%arg0: i32) -> (i32, i32, i32) {
    %c0_i32 = arith.constant 0 : i32
    %c0_i32_0 = arith.constant 0 : i32
    %c0_i32_1 = arith.constant 0 : i32
    return %arg0, %c0_i32, %c0_i32_0 : i32, i32, i32
  }
}

module attributes {stable_mosaic.version = 11 : i64} {
  func.func @_bn_add_relu_kernel(%arg0: i32, %arg1: memref<256x128xf32, #tpu.memory_space<vmem>>, %arg2: memref<256x128xf32, #tpu.memory_space<vmem>>, %arg3: memref<1x128xf32, #tpu.memory_space<vmem>>, %arg4: memref<1x128xf32, #tpu.memory_space<vmem>>, %arg5: memref<256x128xf32, #tpu.memory_space<vmem>>) attributes {dimension_semantics = [#tpu.dimension_semantics<parallel>], iteration_bounds = array<i64: 2>, scalar_prefetch = 0 : i64, scratch_operands = 0 : i64, tpu.core_type = #tpu.core_type<tc>, window_params = [{transform_indices = @transform_0, window_bounds = array<i64: 256, 128>}, {transform_indices = @transform_1, window_bounds = array<i64: 256, 128>}, {pipeline_mode = #tpu.pipeline_mode<synchronous>, transform_indices = @transform_2, window_bounds = array<i64: 1, 128>}, {pipeline_mode = #tpu.pipeline_mode<synchronous>, transform_indices = @transform_3, window_bounds = array<i64: 1, 128>}, {transform_indices = @transform_4, window_bounds = array<i64: 256, 128>}]} {
    %c0 = arith.constant 0 : index
    %c0_0 = arith.constant 0 : index
    %0 = vector.load %arg1[%c0, %c0_0] : memref<256x128xf32, #tpu.memory_space<vmem>>, vector<256x128xf32>
    %c0_1 = arith.constant 0 : index
    %c0_2 = arith.constant 0 : index
    %1 = vector.load %arg3[%c0_1, %c0_2] : memref<1x128xf32, #tpu.memory_space<vmem>>, vector<1x128xf32>
    %2 = vector.broadcast %1 : vector<1x128xf32> to vector<256x128xf32>
    %3 = arith.mulf %0, %2 : vector<256x128xf32>
    %c0_3 = arith.constant 0 : index
    %c0_4 = arith.constant 0 : index
    %4 = vector.load %arg4[%c0_3, %c0_4] : memref<1x128xf32, #tpu.memory_space<vmem>>, vector<1x128xf32>
    %5 = vector.broadcast %4 : vector<1x128xf32> to vector<256x128xf32>
    %6 = arith.addf %3, %5 : vector<256x128xf32>
    %c0_5 = arith.constant 0 : index
    %c0_6 = arith.constant 0 : index
    %7 = vector.load %arg2[%c0_5, %c0_6] : memref<256x128xf32, #tpu.memory_space<vmem>>, vector<256x128xf32>
    %8 = arith.addf %6, %7 : vector<256x128xf32>
    %cst = arith.constant 0.000000e+00 : f32
    %9 = vector.broadcast %cst : f32 to vector<256x128xf32>
    %10 = arith.maximumf %8, %9 : vector<256x128xf32>
    %c0_7 = arith.constant 0 : index
    %c0_8 = arith.constant 0 : index
    %11 = vector.load %arg5[%c0_7, %c0_8] : memref<256x128xf32, #tpu.memory_space<vmem>>, vector<256x128xf32>
    tpu.vector_store %arg5[%c0_7, %c0_8], %10 {strides = array<i32>} : memref<256x128xf32, #tpu.memory_space<vmem>>, vector<256x128xf32>,
    return
  }
  func.func @transform_0(%arg0: i32) -> (i32, i32) {
    %c0_i32 = arith.constant 0 : i32
    %c0_i32_0 = arith.constant 0 : i32
    return %arg0, %c0_i32 : i32, i32
  }
  func.func @transform_1(%arg0: i32) -> (i32, i32) {
    %c0_i32 = arith.constant 0 : i32
    %c0_i32_0 = arith.constant 0 : i32
    return %arg0, %c0_i32 : i32, i32
  }
  func.func @transform_2(%arg0: i32) -> (i32, i32) {
    %c0_i32 = arith.constant 0 : i32
    %c0_i32_0 = arith.constant 0 : i32
    %c0_i32_1 = arith.constant 0 : i32
    return %c0_i32, %c0_i32_0 : i32, i32
  }
  func.func @transform_3(%arg0: i32) -> (i32, i32) {
    %c0_i32 = arith.constant 0 : i32
    %c0_i32_0 = arith.constant 0 : i32
    %c0_i32_1 = arith.constant 0 : i32
    return %c0_i32, %c0_i32_0 : i32, i32
  }
  func.func @transform_4(%arg0: i32) -> (i32, i32) {
    %c0_i32 = arith.constant 0 : i32
    %c0_i32_0 = arith.constant 0 : i32
    return %arg0, %c0_i32 : i32, i32
  }
}

</mosaic_0001>

<llo_original>
// kernel: masked_resnet_forward.19
$region0: #{masked_resnet_forward.19}
  #allocation0 [shape = 'u32[]', space=smem, size = 0x4, offset = 0x4, fixed_abs, tag = 'smem constant byte address 0x4 - core index']
  #allocation1 [shape = 'u32[72,128]{1,0:T(1,128)}', space=vmem, size = 0x9000, scoped, tag = 'internal scratch']
  %s0 = inlined_call_operand.vmem [shape: f32[512,128], index: 0, kind: input, shape index: {}]
  %s1 = inlined_call_operand.vmem [shape: f32[1,128], index: 1, kind: input, shape index: {}]
  %s2 = inlined_call_operand.vmem [shape: f32[1,128], index: 2, kind: input, shape index: {}]
  %s3 = inlined_call_operand.vmem [shape: f32[512,128], index: 3, kind: output, shape index: {}]
  %s4 = sld [smem:[#allocation0]]
  $region45: #{masked_resnet_forward.19} parent=0
    _
  %s6 = ssub.s32 1, %s4
  %s7 = scalar_select 0, %s6, %s4
  loop: start=0, step=1, limit=4
  $region2: #{masked_resnet_forward.19} parent=0 // loop_pre_header
    _
  $region3: #{masked_resnet_forward.19} parent=0 // loop_header
    %s9 = sphi 0, %s13
    %p10 = scmp.ge.s32.totalorder %s9, 4
    %s19 = sphi 0, %s21
    %s22 = sphi 0, %s19
    %s23 = sphi 0, %s22
    %s39 = sphi 0, %s23
    %s43 = sphi 0, %s43
    %s45 = sphi 0, %s43
    %s46 = sphi 0, %s45
    %s60 = sphi 0, %s46
    %s64 = sphi 0, %s64
    %s66 = sphi 0, %s64
    %s67 = sphi 0, %s66
    %s81 = sphi 0, %s67
    %s87 = sphi 0, %s89
    %s90 = sphi 0, %s87
    %s91 = sphi 0, %s90
    %s107 = sphi 0, %s91
  $region4: #{masked_resnet_forward.19} parent=0 // loop_header_branch
    %12 = sbr.rel (%p10) target = $region8
  $region5: #{masked_resnet_forward.19} parent=0 // loop_body
    %s14 = ssub.s32 %s9, 1
    %s15 = ssub.s32 %s9, 2
    %s16 = sadd.s32 %s9, 1
    %s17 = ssub.s32 %s9, %s16
    %p18 = scmp.eq.s32.totalorder %s17, 0
    %s20 = sadd.s32 %s19, 1
    %s21 = scalar_select %p18, %s19, %s20
    %p24 = pneg %p18
    %p25 = scmp.eq.s32.totalorder %s9, 1
    %p26 = por %p24, %p25
    %p27 = scmp.ne.s32.totalorder %s19, %s22
    %p28 = scmp.eq.s32.totalorder %s9, 0
    %p29 = por %p27, %p28
    %p30 = scmp.ne.s32.totalorder %s19, %s22
    %p31 = scmp.eq.s32.totalorder %s14, 1
    %p32 = por %p30, %p31
    %p33 = scmp.ne.s32.totalorder %s22, %s23
    %p34 = scmp.eq.s32.totalorder %s14, 0
    %p35 = por %p33, %p34
    %p36 = scmp.ne.s32.totalorder %s22, %s23
    %p37 = scmp.eq.s32.totalorder %s15, 1
    %p38 = por %p36, %p37
    %p40 = scmp.ne.s32.totalorder %s23, %s39
    %p41 = scmp.eq.s32.totalorder %s15, 0
    %p42 = por %p40, %p41
    %s44 = sadd.s32 %s43, 1
    %p47 = scmp.eq.s32.totalorder %s9, 1
    %p48 = scmp.ne.s32.totalorder %s43, %s45
    %p49 = scmp.eq.s32.totalorder %s9, 0
    %p50 = por %p48, %p49
    %p51 = scmp.ne.s32.totalorder %s43, %s45
    %p52 = scmp.eq.s32.totalorder %s14, 1
    %p53 = por %p51, %p52
    %p54 = scmp.ne.s32.totalorder %s45, %s46
    %p55 = scmp.eq.s32.totalorder %s14, 0
    %p56 = por %p54, %p55
    %p57 = scmp.ne.s32.totalorder %s45, %s46
    %p58 = scmp.eq.s32.totalorder %s15, 1
    %p59 = por %p57, %p58
    %p61 = scmp.ne.s32.totalorder %s46, %s60
    %p62 = scmp.eq.s32.totalorder %s15, 0
    %p63 = por %p61, %p62
    %s65 = sadd.s32 %s64, 1
    %p68 = scmp.eq.s32.totalorder %s9, 1
    %p69 = scmp.ne.s32.totalorder %s64, %s66
    %p70 = scmp.eq.s32.totalorder %s9, 0
    %p71 = por %p69, %p70
    %p72 = scmp.ne.s32.totalorder %s64, %s66
    %p73 = scmp.eq.s32.totalorder %s14, 1
    %p74 = por %p72, %p73
    %p75 = scmp.ne.s32.totalorder %s66, %s67
    %p76 = scmp.eq.s32.totalorder %s14, 0
    %p77 = por %p75, %p76
    %p78 = scmp.ne.s32.totalorder %s66, %s67
    %p79 = scmp.eq.s32.totalorder %s15, 1
    %p80 = por %p78, %p79
    %p82 = scmp.ne.s32.totalorder %s67, %s81
    %p83 = scmp.eq.s32.totalorder %s15, 0
    %p84 = por %p82, %p83
    %s85 = ssub.s32 %s9, %s16
    %p86 = scmp.eq.s32.totalorder %s85, 0
    %s88 = sadd.s32 %s87, 1
    %s89 = scalar_select %p86, %s87, %s88
    %p92 = pneg %p86
    %p93 = scmp.eq.s32.totalorder %s9, 1
    %p94 = por %p92, %p93
    %p95 = scmp.ne.s32.totalorder %s87, %s90
    %p96 = scmp.eq.s32.totalorder %s9, 0
    %p97 = por %p95, %p96
    %p98 = scmp.ne.s32.totalorder %s87, %s90
    %p99 = scmp.eq.s32.totalorder %s14, 1
    %p100 = por %p98, %p99
    %p101 = scmp.ne.s32.totalorder %s90, %s91
    %p102 = scmp.eq.s32.totalorder %s14, 0
    %p103 = por %p101, %p102
    %p104 = scmp.ne.s32.totalorder %s90, %s91
    %p105 = scmp.eq.s32.totalorder %s15, 1
    %p106 = por %p104, %p105
    %p108 = scmp.ne.s32.totalorder %s91, %s107
    %p109 = scmp.eq.s32.totalorder %s15, 0
    %p110 = por %p108, %p109
    %p111 = scmp.le.s32.totalorder 1, %s9
    %p112 = scmp.lt.s32.totalorder %s9, 3
    %p113 = pnand %p111, %p112
    %p114 = pneg %p113
    // Predicated region
    $region9: #{masked_resnet_forward.19} parent=5 // pred_check
      _
    $region10: #{masked_resnet_forward.19} parent=5 // pred_check_branch
      %116 = sbr.rel (%p113) target = $region12
    $region11: #{masked_resnet_forward.19} parent=5 // pred_region
      %s117 = ssub.s32 %s9, 1
      // Predicated region
      $region13: #{masked_resnet_forward.19} parent=11 // pred_check
        %p118 = pneg %p56
      $region14: #{masked_resnet_forward.19} parent=11 // pred_check_branch
        %120 = sbr.rel (%p118) target = $region16
      $region15: #{masked_resnet_forward.19} parent=11 // pred_region
        _
      $region16: #{masked_resnet_forward.19} parent=11 // pred_fallthru
        _
      // Predicated region
      $region17: #{masked_resnet_forward.19} parent=11 // pred_check
        %p121 = pneg %p77
      $region18: #{masked_resnet_forward.19} parent=11 // pred_check_branch
        %123 = sbr.rel (%p121) target = $region20
      $region19: #{masked_resnet_forward.19} parent=11 // pred_region
        _
      $region20: #{masked_resnet_forward.19} parent=11 // pred_fallthru
        _
    $region12: #{masked_resnet_forward.19} parent=5 // pred_fallthru
      _
    %p124 = scmp.lt.s32.totalorder %s9, 2
    // Predicated region
    $region21: #{masked_resnet_forward.19} parent=5 // pred_check
      %p125 = pneg %p124
    $region22: #{masked_resnet_forward.19} parent=5 // pred_check_branch
      %127 = sbr.rel (%p125) target = $region24
    $region23: #{masked_resnet_forward.19} parent=5 // pred_region
      // Predicated region
      $region25: #{masked_resnet_forward.19} parent=23 // pred_check
        %p128 = pneg %p29
      $region26: #{masked_resnet_forward.19} parent=23 // pred_check_branch
        %130 = sbr.rel (%p128) target = $region28
      $region27: #{masked_resnet_forward.19} parent=23 // pred_region
        %s131 = smul.u32 32, %s9
        %p132 = scmp.lt.s32.totalorder %s131, 63
        %s133 = scalar_select %p132, %s131, 63
        %s134 = smul.addr %s133, 8
        %s135 = scalar_lea.vmem %s0, %s134
        %s136 = smul.u32 32, %s9
      $region28: #{masked_resnet_forward.19} parent=23 // pred_fallthru
        _
    $region24: #{masked_resnet_forward.19} parent=5 // pred_fallthru
      _
    %p137 = scmp.le.s32.totalorder 1, %s9
    %p138 = scmp.lt.s32.totalorder %s9, 3
    %p139 = pnand %p137, %p138
    %p140 = pneg %p139
    // Predicated region
    $region29: #{masked_resnet_forward.19} parent=5 // pred_check
      _
    $region30: #{masked_resnet_forward.19} parent=5 // pred_check_branch
      %142 = sbr.rel (%p139) target = $region32
    $region31: #{masked_resnet_forward.19} parent=5 // pred_region
      %s143 = ssub.s32 %s9, 1
      %s144 = smul.u32 32, %s14
      %p145 = scmp.lt.s32.totalorder %s144, 63
      %s146 = scalar_select %p145, %s144, 63
      %s147 = smul.addr %s146, 8
      %s148 = scalar_lea.vmem %s0, %s147
      %p149 = pneg %p35
      %p150 = pneg %p32
      %p151 = pneg %p56
      %p152 = pneg %p53
      %p153 = pneg %p77
      %p154 = pneg %p74
      %p155 = pneg %p103
      %p156 = pneg %p100
      %s157 = smul.u32 32, %s14
      %p158 = scmp.lt.s32.totalorder %s157, 63
      %s159 = scalar_select %p158, %s157, 63
      %s160 = smul.addr %s159, 8
      %s161 = scalar_lea.vmem %s3, %s160
      %s162 = smul.u32 32, %s14
      %p163 = scmp.lt.s32.totalorder %s162, 63
      %s164 = scalar_select %p163, %s162, 63
      %s165 = smul.addr %s164, 8
      %s166 = scalar_lea.vmem %s0, %s165
      %s167 = smul.u32 32, %s14
      %s168 = smul.u32 32, %s14
      %p169 = scmp.lt.s32.totalorder %s168, 63
      %s170 = scalar_select %p169, %s168, 63
      %s171 = smul.addr %s170, 8
      %s172 = scalar_lea.vmem %s3, %s171
      %s173 = smul.u32 32, %s14
      %v174 = vld [vmem:[%s166] sm:$0xff]
      %v175 = vld [vmem:[%s166 + $0x8] sm:$0xff]
      %v176 = vld [vmem:[%s166 + $0x10] sm:$0xff]
      %v177 = vld [vmem:[%s166 + $0x18] sm:$0xff]
      %v178 = vld [vmem:[%s166 + $0x20] sm:$0xff]
      %v179 = vld [vmem:[%s166 + $0x28] sm:$0xff]
      %v180 = vld [vmem:[%s166 + $0x30] sm:$0xff]
      %v181 = vld [vmem:[%s166 + $0x38] sm:$0xff]
      %v182 = vld [vmem:[%s166 + $0x40] sm:$0xff]
      %v183 = vld [vmem:[%s166 + $0x48] sm:$0xff]
      %v184 = vld [vmem:[%s166 + $0x50] sm:$0xff]
      %v185 = vld [vmem:[%s166 + $0x58] sm:$0xff]
      %v186 = vld [vmem:[%s166 + $0x60] sm:$0xff]
      %v187 = vld [vmem:[%s166 + $0x68] sm:$0xff]
      %v188 = vld [vmem:[%s166 + $0x70] sm:$0xff]
      %v189 = vld [vmem:[%s166 + $0x78] sm:$0xff]
      %v190 = vld [vmem:[%s166 + $0x80] sm:$0xff]
      %v191 = vld [vmem:[%s166 + $0x88] sm:$0xff]
      %v192 = vld [vmem:[%s166 + $0x90] sm:$0xff]
      %v193 = vld [vmem:[%s166 + $0x98] sm:$0xff]
      %v194 = vld [vmem:[%s166 + $0xa0] sm:$0xff]
      %v195 = vld [vmem:[%s166 + $0xa8] sm:$0xff]
      %v196 = vld [vmem:[%s166 + $0xb0] sm:$0xff]
      %v197 = vld [vmem:[%s166 + $0xb8] sm:$0xff]
      %v198 = vld [vmem:[%s166 + $0xc0] sm:$0xff]
      %v199 = vld [vmem:[%s166 + $0xc8] sm:$0xff]
      %v200 = vld [vmem:[%s166 + $0xd0] sm:$0xff]
      %v201 = vld [vmem:[%s166 + $0xd8] sm:$0xff]
      %v202 = vld [vmem:[%s166 + $0xe0] sm:$0xff]
      %v203 = vld [vmem:[%s166 + $0xe8] sm:$0xff]
      %v204 = vld [vmem:[%s166 + $0xf0] sm:$0xff]
      %v205 = vld [vmem:[%s166 + $0xf8] sm:$0xff]
      %v206 = vld [vmem:[%s1] sm:$0x1]
      %v208 = vperm.slane %v206, 0
      %v210 = vmul.f32 %v174, %v208
      %v211 = vmul.f32 %v175, %v208
      %v212 = vmul.f32 %v176, %v208
      %v213 = vmul.f32 %v177, %v208
      %v214 = vmul.f32 %v178, %v208
      %v215 = vmul.f32 %v179, %v208
      %v216 = vmul.f32 %v180, %v208
      %v217 = vmul.f32 %v181, %v208
      %v218 = vmul.f32 %v182, %v208
      %v219 = vmul.f32 %v183, %v208
      %v220 = vmul.f32 %v184, %v208
      %v221 = vmul.f32 %v185, %v208
      %v222 = vmul.f32 %v186, %v208
      %v223 = vmul.f32 %v187, %v208
      %v224 = vmul.f32 %v188, %v208
      %v225 = vmul.f32 %v189, %v208
      %v226 = vmul.f32 %v190, %v208
      %v227 = vmul.f32 %v191, %v208
      %v228 = vmul.f32 %v192, %v208
      %v229 = vmul.f32 %v193, %v208
      %v230 = vmul.f32 %v194, %v208
      %v231 = vmul.f32 %v195, %v208
      %v232 = vmul.f32 %v196, %v208
      %v233 = vmul.f32 %v197, %v208
      %v234 = vmul.f32 %v198, %v208
      %v235 = vmul.f32 %v199, %v208
      %v236 = vmul.f32 %v200, %v208
      %v237 = vmul.f32 %v201, %v208
      %v238 = vmul.f32 %v202, %v208
      %v239 = vmul.f32 %v203, %v208
      %v240 = vmul.f32 %v204, %v208
      %v241 = vmul.f32 %v205, %v208
      %v242 = vld [vmem:[%s2] sm:$0x1]
      %v244 = vperm.slane %v242, 0
      %v246 = vadd.f32 %v210, %v244
      %v247 = vadd.f32 %v211, %v244
      %v248 = vadd.f32 %v212, %v244
      %v249 = vadd.f32 %v213, %v244
      %v250 = vadd.f32 %v214, %v244
      %v251 = vadd.f32 %v215, %v244
      %v252 = vadd.f32 %v216, %v244
      %v253 = vadd.f32 %v217, %v244
      %v254 = vadd.f32 %v218, %v244
      %v255 = vadd.f32 %v219, %v244
      %v256 = vadd.f32 %v220, %v244
      %v257 = vadd.f32 %v221, %v244
      %v258 = vadd.f32 %v222, %v244
      %v259 = vadd.f32 %v223, %v244
      %v260 = vadd.f32 %v224, %v244
      %v261 = vadd.f32 %v225, %v244
      %v262 = vadd.f32 %v226, %v244
      %v263 = vadd.f32 %v227, %v244
      %v264 = vadd.f32 %v228, %v244
      %v265 = vadd.f32 %v229, %v244
      %v266 = vadd.f32 %v230, %v244
      %v267 = vadd.f32 %v231, %v244
      %v268 = vadd.f32 %v232, %v244
      %v269 = vadd.f32 %v233, %v244
      %v270 = vadd.f32 %v234, %v244
      %v271 = vadd.f32 %v235, %v244
      %v272 = vadd.f32 %v236, %v244
      %v273 = vadd.f32 %v237, %v244
      %v274 = vadd.f32 %v238, %v244
      %v275 = vadd.f32 %v239, %v244
      %v276 = vadd.f32 %v240, %v244
      %v277 = vadd.f32 %v241, %v244
      %v278 = vmax.f32 %v246, 0.0
      %v279 = vmax.f32 %v247, 0.0
      %v280 = vmax.f32 %v248, 0.0
      %v281 = vmax.f32 %v249, 0.0
      %v282 = vmax.f32 %v250, 0.0
      %v283 = vmax.f32 %v251, 0.0
      %v284 = vmax.f32 %v252, 0.0
      %v285 = vmax.f32 %v253, 0.0
      %v286 = vmax.f32 %v254, 0.0
      %v287 = vmax.f32 %v255, 0.0
      %v288 = vmax.f32 %v256, 0.0
      %v289 = vmax.f32 %v257, 0.0
      %v290 = vmax.f32 %v258, 0.0
      %v291 = vmax.f32 %v259, 0.0
      %v292 = vmax.f32 %v260, 0.0
      %v293 = vmax.f32 %v261, 0.0
      %v294 = vmax.f32 %v262, 0.0
      %v295 = vmax.f32 %v263, 0.0
      %v296 = vmax.f32 %v264, 0.0
      %v297 = vmax.f32 %v265, 0.0
      %v298 = vmax.f32 %v266, 0.0
      %v299 = vmax.f32 %v267, 0.0
      %v300 = vmax.f32 %v268, 0.0
      %v301 = vmax.f32 %v269, 0.0
      %v302 = vmax.f32 %v270, 0.0
      %v303 = vmax.f32 %v271, 0.0
      %v304 = vmax.f32 %v272, 0.0
      %v305 = vmax.f32 %v273, 0.0
      %v306 = vmax.f32 %v274, 0.0
      %v307 = vmax.f32 %v275, 0.0
      %v308 = vmax.f32 %v276, 0.0
      %v309 = vmax.f32 %v277, 0.0
      %310 = vst [vmem:[%s172] sm:$0xff] %v278
      %311 = vst [vmem:[%s172 + $0x8] sm:$0xff] %v279
      %312 = vst [vmem:[%s172 + $0x10] sm:$0xff] %v280
      %313 = vst [vmem:[%s172 + $0x18] sm:$0xff] %v281
      %314 = vst [vmem:[%s172 + $0x20] sm:$0xff] %v282
      %315 = vst [vmem:[%s172 + $0x28] sm:$0xff] %v283
      %316 = vst [vmem:[%s172 + $0x30] sm:$0xff] %v284
      %317 = vst [vmem:[%s172 + $0x38] sm:$0xff] %v285
      %318 = vst [vmem:[%s172 + $0x40] sm:$0xff] %v286
      %319 = vst [vmem:[%s172 + $0x48] sm:$0xff] %v287
      %320 = vst [vmem:[%s172 + $0x50] sm:$0xff] %v288
      %321 = vst [vmem:[%s172 + $0x58] sm:$0xff] %v289
      %322 = vst [vmem:[%s172 + $0x60] sm:$0xff] %v290
      %323 = vst [vmem:[%s172 + $0x68] sm:$0xff] %v291
      %324 = vst [vmem:[%s172 + $0x70] sm:$0xff] %v292
      %325 = vst [vmem:[%s172 + $0x78] sm:$0xff] %v293
      %326 = vst [vmem:[%s172 + $0x80] sm:$0xff] %v294
      %327 = vst [vmem:[%s172 + $0x88] sm:$0xff] %v295
      %328 = vst [vmem:[%s172 + $0x90] sm:$0xff] %v296
      %329 = vst [vmem:[%s172 + $0x98] sm:$0xff] %v297
      %330 = vst [vmem:[%s172 + $0xa0] sm:$0xff] %v298
      %331 = vst [vmem:[%s172 + $0xa8] sm:$0xff] %v299
      %332 = vst [vmem:[%s172 + $0xb0] sm:$0xff] %v300
      %333 = vst [vmem:[%s172 + $0xb8] sm:$0xff] %v301
      %334 = vst [vmem:[%s172 + $0xc0] sm:$0xff] %v302
      %335 = vst [vmem:[%s172 + $0xc8] sm:$0xff] %v303
      %336 = vst [vmem:[%s172 + $0xd0] sm:$0xff] %v304
      %337 = vst [vmem:[%s172 + $0xd8] sm:$0xff] %v305
      %338 = vst [vmem:[%s172 + $0xe0] sm:$0xff] %v306
      %339 = vst [vmem:[%s172 + $0xe8] sm:$0xff] %v307
      %340 = vst [vmem:[%s172 + $0xf0] sm:$0xff] %v308
      %341 = vst [vmem:[%s172 + $0xf8] sm:$0xff] %v309
      %s342 = smul.u32 32, %s14
      %p343 = scmp.lt.s32.totalorder %s342, 63
      %s344 = scalar_select %p343, %s342, 63
      %s345 = smul.addr %s344, 8
      %s346 = scalar_lea.vmem %s3, %s345
      // Predicated region
      $region33: #{masked_resnet_forward.19} parent=31 // pred_check
        %p347 = pneg %p100
      $region34: #{masked_resnet_forward.19} parent=31 // pred_check_branch
        %349 = sbr.rel (%p347) target = $region36
      $region35: #{masked_resnet_forward.19} parent=31 // pred_region
        %s350 = smul.u32 32, %s14
      $region36: #{masked_resnet_forward.19} parent=31 // pred_fallthru
        _
    $region32: #{masked_resnet_forward.19} parent=5 // pred_fallthru
      _
    %p351 = scmp.le.s32.totalorder 2, %s9
    // Predicated region
    $region37: #{masked_resnet_forward.19} parent=5 // pred_check
      %p352 = pneg %p351
    $region38: #{masked_resnet_forward.19} parent=5 // pred_check_branch
      %354 = sbr.rel (%p352) target = $region40
    $region39: #{masked_resnet_forward.19} parent=5 // pred_region
      %s355 = ssub.s32 %s9, 2
      // Predicated region
      $region41: #{masked_resnet_forward.19} parent=39 // pred_check
        %p356 = pneg %p106
      $region42: #{masked_resnet_forward.19} parent=39 // pred_check_branch
        %358 = sbr.rel (%p356) target = $region44
      $region43: #{masked_resnet_forward.19} parent=39 // pred_region
        %s359 = smul.u32 32, %s15
        %p360 = scmp.lt.s32.totalorder %s359, 63
        %s361 = scalar_select %p360, %s359, 63
        %s362 = smul.addr %s361, 8
        %s363 = scalar_lea.vmem %s3, %s362
      $region44: #{masked_resnet_forward.19} parent=39 // pred_fallthru
        _
    $region40: #{masked_resnet_forward.19} parent=5 // pred_fallthru
      _
  $region6: #{masked_resnet_forward.19} parent=0 // loop_footer
    %s13 = sadd.s32 1, %s9
  $region7: #{masked_resnet_forward.19} parent=0 // loop_footer_branch
    %8 = sbr.rel target = $region3
  $region8: #{masked_resnet_forward.19} parent=0 // loop_exit
    _

// kernel: masked_resnet_forward.18
$region0: #{masked_resnet_forward.18}
  #allocation0 [shape = 'u32[]', space=smem, size = 0x4, offset = 0x4, fixed_abs, tag = 'smem constant byte address 0x4 - core index']
  #allocation1 [shape = 'u32[72,128]{1,0:T(1,128)}', space=vmem, size = 0x9000, scoped, tag = 'internal scratch']
  %s0 = inlined_call_operand.vmem [shape: bf16[512,200], index: 0, kind: input, shape index: {}]
  %s1 = inlined_call_operand.vmem [shape: f32[512,1], index: 1, kind: input, shape index: {}]
  %s2 = inlined_call_operand.vmem [shape: bf16[200,128], index: 2, kind: input, shape index: {}]
  %s3 = inlined_call_operand.vmem [shape: f32[512,128], index: 3, kind: output, shape index: {0}]
  %s4 = inlined_call_operand.vmem [shape: f32[2,2,128], index: 4, kind: output, shape index: {1}]
  %5 = xla_tuple %s3, %s4
  %s6 = sld [smem:[#allocation0]]
  $region53: #{masked_resnet_forward.18} parent=0
    _
  %s8 = ssub.s32 1, %s6
  %s9 = scalar_select 0, %s8, %s6
  loop: start=0, step=1, limit=4
  $region2: #{masked_resnet_forward.18} parent=0 // loop_pre_header
    _
  $region3: #{masked_resnet_forward.18} parent=0 // loop_header
    %s11 = sphi 0, %s15
    %p12 = scmp.ge.s32.totalorder %s11, 4
    %s21 = sphi 0, %s23
    %s24 = sphi 0, %s21
    %s25 = sphi 0, %s24
    %s41 = sphi 0, %s25
    %s47 = sphi 0, %s49
    %s50 = sphi 0, %s47
    %s51 = sphi 0, %s50
    %s67 = sphi 0, %s51
    %s71 = sphi 0, %s71
    %s73 = sphi 0, %s71
    %s74 = sphi 0, %s73
    %s88 = sphi 0, %s74
    %s94 = sphi 0, %s96
    %s97 = sphi 0, %s94
    %s98 = sphi 0, %s97
    %s114 = sphi 0, %s98
    %s120 = sphi 0, %s122
    %s123 = sphi 0, %s120
    %s124 = sphi 0, %s123
    %s140 = sphi 0, %s124
  $region4: #{masked_resnet_forward.18} parent=0 // loop_header_branch
    %14 = sbr.rel (%p12) target = $region8
  $region5: #{masked_resnet_forward.18} parent=0 // loop_body
    %s16 = ssub.s32 %s11, 1
    %s17 = ssub.s32 %s11, 2
    %s18 = sadd.s32 %s11, 1
    %s19 = ssub.s32 %s11, %s18
    %p20 = scmp.eq.s32.totalorder %s19, 0
    %s22 = sadd.s32 %s21, 1
    %s23 = scalar_select %p20, %s21, %s22
    %p26 = pneg %p20
    %p27 = scmp.eq.s32.totalorder %s11, 1
    %p28 = por %p26, %p27
    %p29 = scmp.ne.s32.totalorder %s21, %s24
    %p30 = scmp.eq.s32.totalorder %s11, 0
    %p31 = por %p29, %p30
    %p32 = scmp.ne.s32.totalorder %s21, %s24
    %p33 = scmp.eq.s32.totalorder %s16, 1
    %p34 = por %p32, %p33
    %p35 = scmp.ne.s32.totalorder %s24, %s25
    %p36 = scmp.eq.s32.totalorder %s16, 0
    %p37 = por %p35, %p36
    %p38 = scmp.ne.s32.totalorder %s24, %s25
    %p39 = scmp.eq.s32.totalorder %s17, 1
    %p40 = por %p38, %p39
    %p42 = scmp.ne.s32.totalorder %s25, %s41
    %p43 = scmp.eq.s32.totalorder %s17, 0
    %p44 = por %p42, %p43
    %s45 = ssub.s32 %s11, %s18
    %p46 = scmp.eq.s32.totalorder %s45, 0
    %s48 = sadd.s32 %s47, 1
    %s49 = scalar_select %p46, %s47, %s48
    %p52 = pneg %p46
    %p53 = scmp.eq.s32.totalorder %s11, 1
    %p54 = por %p52, %p53
    %p55 = scmp.ne.s32.totalorder %s47, %s50
    %p56 = scmp.eq.s32.totalorder %s11, 0
    %p57 = por %p55, %p56
    %p58 = scmp.ne.s32.totalorder %s47, %s50
    %p59 = scmp.eq.s32.totalorder %s16, 1
    %p60 = por %p58, %p59
    %p61 = scmp.ne.s32.totalorder %s50, %s51
    %p62 = scmp.eq.s32.totalorder %s16, 0
    %p63 = por %p61, %p62
    %p64 = scmp.ne.s32.totalorder %s50, %s51
    %p65 = scmp.eq.s32.totalorder %s17, 1
    %p66 = por %p64, %p65
    %p68 = scmp.ne.s32.totalorder %s51, %s67
    %p69 = scmp.eq.s32.totalorder %s17, 0
    %p70 = por %p68, %p69
    %s72 = sadd.s32 %s71, 1
    %p75 = scmp.eq.s32.totalorder %s11, 1
    %p76 = scmp.ne.s32.totalorder %s71, %s73
    %p77 = scmp.eq.s32.totalorder %s11, 0
    %p78 = por %p76, %p77
    %p79 = scmp.ne.s32.totalorder %s71, %s73
    %p80 = scmp.eq.s32.totalorder %s16, 1
    %p81 = por %p79, %p80
    %p82 = scmp.ne.s32.totalorder %s73, %s74
    %p83 = scmp.eq.s32.totalorder %s16, 0
    %p84 = por %p82, %p83
    %p85 = scmp.ne.s32.totalorder %s73, %s74
    %p86 = scmp.eq.s32.totalorder %s17, 1
    %p87 = por %p85, %p86
    %p89 = scmp.ne.s32.totalorder %s74, %s88
    %p90 = scmp.eq.s32.totalorder %s17, 0
    %p91 = por %p89, %p90
    %s92 = ssub.s32 %s11, %s18
    %p93 = scmp.eq.s32.totalorder %s92, 0
    %s95 = sadd.s32 %s94, 1
    %s96 = scalar_select %p93, %s94, %s95
    %p99 = pneg %p93
    %p100 = scmp.eq.s32.totalorder %s11, 1
    %p101 = por %p99, %p100
    %p102 = scmp.ne.s32.totalorder %s94, %s97
    %p103 = scmp.eq.s32.totalorder %s11, 0
    %p104 = por %p102, %p103
    %p105 = scmp.ne.s32.totalorder %s94, %s97
    %p106 = scmp.eq.s32.totalorder %s16, 1
    %p107 = por %p105, %p106
    %p108 = scmp.ne.s32.totalorder %s97, %s98
    %p109 = scmp.eq.s32.totalorder %s16, 0
    %p110 = por %p108, %p109
    %p111 = scmp.ne.s32.totalorder %s97, %s98
    %p112 = scmp.eq.s32.totalorder %s17, 1
    %p113 = por %p111, %p112
    %p115 = scmp.ne.s32.totalorder %s98, %s114
    %p116 = scmp.eq.s32.totalorder %s17, 0
    %p117 = por %p115, %p116
    %s118 = ssub.s32 %s11, %s18
    %p119 = scmp.eq.s32.totalorder %s118, 0
    %s121 = sadd.s32 %s120, 1
    %s122 = scalar_select %p119, %s120, %s121
    %p125 = pneg %p119
    %p126 = scmp.eq.s32.totalorder %s11, 1
    %p127 = por %p125, %p126
    %p128 = scmp.ne.s32.totalorder %s120, %s123
    %p129 = scmp.eq.s32.totalorder %s11, 0
    %p130 = por %p128, %p129
    %p131 = scmp.ne.s32.totalorder %s120, %s123
    %p132 = scmp.eq.s32.totalorder %s16, 1
    %p133 = por %p131, %p132
    %p134 = scmp.ne.s32.totalorder %s123, %s124
    %p135 = scmp.eq.s32.totalorder %s16, 0
    %p136 = por %p134, %p135
    %p137 = scmp.ne.s32.totalorder %s123, %s124
    %p138 = scmp.eq.s32.totalorder %s17, 1
    %p139 = por %p137, %p138
    %p141 = scmp.ne.s32.totalorder %s124, %s140
    %p142 = scmp.eq.s32.totalorder %s17, 0
    %p143 = por %p141, %p142
    %p144 = scmp.le.s32.totalorder 1, %s11
    %p145 = scmp.lt.s32.totalorder %s11, 3
    %p146 = pnand %p144, %p145
    %p147 = pneg %p146
    // Predicated region
    $region9: #{masked_resnet_forward.18} parent=5 // pred_check
      _
    $region10: #{masked_resnet_forward.18} parent=5 // pred_check_branch
      %149 = sbr.rel (%p146) target = $region12
    $region11: #{masked_resnet_forward.18} parent=5 // pred_region
      %s150 = ssub.s32 %s11, 1
      // Predicated region
      $region13: #{masked_resnet_forward.18} parent=11 // pred_check
        %p151 = pneg %p84
      $region14: #{masked_resnet_forward.18} parent=11 // pred_check_branch
        %153 = sbr.rel (%p151) target = $region16
      $region15: #{masked_resnet_forward.18} parent=11 // pred_region
        _
      $region16: #{masked_resnet_forward.18} parent=11 // pred_fallthru
        _
    $region12: #{masked_resnet_forward.18} parent=5 // pred_fallthru
      _
    %p154 = scmp.lt.s32.totalorder %s11, 2
    // Predicated region
    $region17: #{masked_resnet_forward.18} parent=5 // pred_check
      %p155 = pneg %p154
    $region18: #{masked_resnet_forward.18} parent=5 // pred_check_branch
      %157 = sbr.rel (%p155) target = $region20
    $region19: #{masked_resnet_forward.18} parent=5 // pred_region
      // Predicated region
      $region21: #{masked_resnet_forward.18} parent=19 // pred_check
        %p158 = pneg %p31
      $region22: #{masked_resnet_forward.18} parent=19 // pred_check_branch
        %160 = sbr.rel (%p158) target = $region24
      $region23: #{masked_resnet_forward.18} parent=19 // pred_region
        %s161 = smul.u32 32, %s11
        %p162 = scmp.lt.s32.totalorder %s161, 63
        %s163 = scalar_select %p162, %s161, 63
        %s164 = smul.addr %s163, 2
        %s165 = smul.addr %s164, 4
        %s166 = scalar_lea.vmem %s0, %s165
        %s167 = smul.u32 32, %s11
      $region24: #{masked_resnet_forward.18} parent=19 // pred_fallthru
        _
      // Predicated region
      $region25: #{masked_resnet_forward.18} parent=19 // pred_check
        %p168 = pneg %p57
      $region26: #{masked_resnet_forward.18} parent=19 // pred_check_branch
        %170 = sbr.rel (%p168) target = $region28
      $region27: #{masked_resnet_forward.18} parent=19 // pred_region
        %s171 = smul.u32 32, %s11
        %p172 = scmp.lt.s32.totalorder %s171, 63
        %s173 = scalar_select %p172, %s171, 63
        %s174 = smul.addr %s173, 8
        %s175 = scalar_lea.vmem %s1, %s174
        %s176 = smul.u32 32, %s11
      $region28: #{masked_resnet_forward.18} parent=19 // pred_fallthru
        _
    $region20: #{masked_resnet_forward.18} parent=5 // pred_fallthru
      _
    %p177 = scmp.le.s32.totalorder 1, %s11
    %p178 = scmp.lt.s32.totalorder %s11, 3
    %p179 = pnand %p177, %p178
    %p180 = pneg %p179
    // Predicated region
    $region29: #{masked_resnet_forward.18} parent=5 // pred_check
      _
    $region30: #{masked_resnet_forward.18} parent=5 // pred_check_branch
      %182 = sbr.rel (%p179) target = $region32
    $region31: #{masked_resnet_forward.18} parent=5 // pred_region
      %s183 = ssub.s32 %s11, 1
      %s184 = smul.u32 32, %s16
      %p185 = scmp.lt.s32.totalorder %s184, 63
      %s186 = scalar_select %p185, %s184, 63
      %s187 = smul.addr %s186, 2
      %s188 = smul.addr %s187, 4
      %s189 = scalar_lea.vmem %s0, %s188
      %p190 = pneg %p37
      %p191 = pneg %p34
      %s192 = smul.u32 32, %s16
      %p193 = scmp.lt.s32.totalorder %s192, 63
      %s194 = scalar_select %p193, %s192, 63
      %s195 = smul.addr %s194, 8
      %s196 = scalar_lea.vmem %s1, %s195
      %p197 = pneg %p63
      %p198 = pneg %p60
      %p199 = pneg %p84
      %p200 = pneg %p81
      %p201 = pneg %p110
      %p202 = pneg %p107
      %s203 = smul.u32 32, %s16
      %p204 = scmp.lt.s32.totalorder %s203, 63
      %s205 = scalar_select %p204, %s203, 63
      %s206 = smul.addr %s205, 8
      %s207 = scalar_lea.vmem %s3, %s206
      %p208 = pneg %p136
      %p209 = pneg %p133
      %p210 = scmp.lt.s32.totalorder %s16, 1
      %s211 = scalar_select %p210, %s16, 1
      %s212 = smul.addr %s211, 2
      %s213 = scalar_lea.vmem %s4, %s212
      %s214 = smul.u32 32, %s16
      %p215 = scmp.lt.s32.totalorder %s214, 63
      %s216 = scalar_select %p215, %s214, 63
      %s217 = smul.addr %s216, 2
      %s218 = smul.addr %s217, 4
      %s219 = scalar_lea.vmem %s0, %s218
      %s220 = smul.u32 32, %s16
      %s221 = smul.u32 32, %s16
      %p222 = scmp.lt.s32.totalorder %s221, 63
      %s223 = scalar_select %p222, %s221, 63
      %s224 = smul.addr %s223, 8
      %s225 = scalar_lea.vmem %s1, %s224
      %s226 = smul.u32 32, %s16
      %s227 = smul.u32 32, %s16
      %p228 = scmp.lt.s32.totalorder %s227, 63
      %s229 = scalar_select %p228, %s227, 63
      %s230 = smul.addr %s229, 8
      %s231 = scalar_lea.vmem %s3, %s230
      %s232 = smul.u32 32, %s16
      %p233 = scmp.lt.s32.totalorder %s16, 1
      %s234 = scalar_select %p233, %s16, 1
      %s235 = smul.addr %s234, 2
      %s236 = scalar_lea.vmem %s4, %s235
      %v238 = vld [vmem:[%s219] sm:$0xff]
      %v239 = vld [vmem:[%s219 + $0x8] sm:$0xff]
      %v240 = vld [vmem:[%s219 + $0x10] sm:$0xff]
      %v241 = vld [vmem:[%s219 + $0x18] sm:$0xff]
      %v242 = vld [vmem:[%s219 + $0x20] sm:$0xff]
      %v243 = vld [vmem:[%s219 + $0x28] sm:$0xff]
      %v244 = vld [vmem:[%s219 + $0x30] sm:$0xff]
      %v245 = vld [vmem:[%s219 + $0x38] sm:$0xff]
      %v246 = vld [vmem:[%s219 + $0x40] sm:$0xff]
      %v247 = vld [vmem:[%s219 + $0x48] sm:$0xff]
      %v248 = vld [vmem:[%s219 + $0x50] sm:$0xff]
      %v249 = vld [vmem:[%s219 + $0x58] sm:$0xff]
      %v250 = vld [vmem:[%s219 + $0x60] sm:$0xff]
      %v251 = vld [vmem:[%s219 + $0x68] sm:$0xff]
      %v252 = vld [vmem:[%s219 + $0x70] sm:$0xff]
      %v253 = vld [vmem:[%s219 + $0x78] sm:$0xff]
      %v254 = vld [vmem:[%s219 + $0x80] sm:$0xff]
      %v255 = vld [vmem:[%s219 + $0x88] sm:$0xff]
      %v256 = vld [vmem:[%s219 + $0x90] sm:$0xff]
      %v257 = vld [vmem:[%s219 + $0x98] sm:$0xff]
      %v258 = vld [vmem:[%s219 + $0xa0] sm:$0xff]
      %v259 = vld [vmem:[%s219 + $0xa8] sm:$0xff]
      %v260 = vld [vmem:[%s219 + $0xb0] sm:$0xff]
      %v261 = vld [vmem:[%s219 + $0xb8] sm:$0xff]
      %v262 = vld [vmem:[%s219 + $0xc0] sm:$0xff]
      %v263 = vld [vmem:[%s219 + $0xc8] sm:$0xff]
      %v264 = vld [vmem:[%s219 + $0xd0] sm:$0xff]
      %v265 = vld [vmem:[%s219 + $0xd8] sm:$0xff]
      %v266 = vld [vmem:[%s219 + $0xe0] sm:$0xff]
      %v267 = vld [vmem:[%s219 + $0xe8] sm:$0xff]
      %v268 = vld [vmem:[%s219 + $0xf0] sm:$0xff]
      %v269 = vld [vmem:[%s219 + $0xf8] sm:$0xff]
      %v270 = vld [vmem:[%s2] sm:$0xf]
      %v271 = vld [vmem:[%s2 + $0x4] sm:$0xf]
      %v272 = vld [vmem:[%s2 + $0x8] sm:$0xf]
      %v273 = vld [vmem:[%s2 + $0xc] sm:$0xf]
      %v274 = vld [vmem:[%s2 + $0x10] sm:$0xf]
      %v275 = vld [vmem:[%s2 + $0x14] sm:$0xf]
      %v276 = vld [vmem:[%s2 + $0x18] sm:$0xf]
      %v277 = vld [vmem:[%s2 + $0x1c] sm:$0xf]
      %v278 = vld [vmem:[%s2 + $0x20] sm:$0xf]
      %v279 = vld [vmem:[%s2 + $0x24] sm:$0xf]
      %v280 = vld [vmem:[%s2 + $0x28] sm:$0xf]
      %v281 = vld [vmem:[%s2 + $0x2c] sm:$0xf]
      %v282 = vld [vmem:[%s2 + $0x30] sm:$0xf]
      %v283 = vld [vmem:[%s2 + $0x34] sm:$0xf]
      %v284 = vld [vmem:[%s2 + $0x38] sm:$0xf]
      %v285 = vld [vmem:[%s2 + $0x3c] sm:$0xf]
      %v286 = vld [vmem:[%s2 + $0x40] sm:$0xf]
      %v287 = vld [vmem:[%s2 + $0x44] sm:$0xf]
      %v288 = vld [vmem:[%s2 + $0x48] sm:$0xf]
      %v289 = vld [vmem:[%s2 + $0x4c] sm:$0xf]
      %v290 = vld [vmem:[%s2 + $0x50] sm:$0xf]
      %v291 = vld [vmem:[%s2 + $0x54] sm:$0xf]
      %v292 = vld [vmem:[%s2 + $0x58] sm:$0xf]
      %v293 = vld [vmem:[%s2 + $0x5c] sm:$0xf]
      %v294 = vld [vmem:[%s2 + $0x60] sm:$0xf]
      %v327 = vunpack.c.l.b16 %v238
      %v328 = vunpack.c.h.b16 %v238
      %v329 = vunpack.c.l.b16 %v239
      %v330 = vunpack.c.h.b16 %v239
      %v331 = vunpack.c.l.b16 %v240
      %v332 = vunpack.c.h.b16 %v240
      %v333 = vunpack.c.l.b16 %v241
      %v334 = vunpack.c.h.b16 %v241
      %v335 = vunpack.c.l.b16 %v242
      %v336 = vunpack.c.h.b16 %v242
      %v337 = vunpack.c.l.b16 %v243
      %v338 = vunpack.c.h.b16 %v243
      %v339 = vunpack.c.l.b16 %v244
      %v340 = vunpack.c.h.b16 %v244
      %v341 = vunpack.c.l.b16 %v245
      %v342 = vunpack.c.h.b16 %v245
      %v343 = vunpack.c.l.b16 %v246
      %v344 = vunpack.c.h.b16 %v246
      %v345 = vunpack.c.l.b16 %v247
      %v346 = vunpack.c.h.b16 %v247
      %v347 = vunpack.c.l.b16 %v248
      %v348 = vunpack.c.h.b16 %v248
      %v349 = vunpack.c.l.b16 %v249
      %v350 = vunpack.c.h.b16 %v249
      %v351 = vunpack.c.l.b16 %v250
      %v352 = vunpack.c.h.b16 %v250
      %v353 = vunpack.c.l.b16 %v251
      %v354 = vunpack.c.h.b16 %v251
      %v355 = vunpack.c.l.b16 %v252
      %v356 = vunpack.c.h.b16 %v252
      %v357 = vunpack.c.l.b16 %v253
      %v358 = vunpack.c.h.b16 %v253
      %v359 = vunpack.c.l.b16 %v254
      %v360 = vunpack.c.h.b16 %v254
      %v361 = vunpack.c.l.b16 %v255
      %v362 = vunpack.c.h.b16 %v255
      %v363 = vunpack.c.l.b16 %v256
      %v364 = vunpack.c.h.b16 %v256
      %v365 = vunpack.c.l.b16 %v257
      %v366 = vunpack.c.h.b16 %v257
      %v367 = vunpack.c.l.b16 %v258
      %v368 = vunpack.c.h.b16 %v258
      %v369 = vunpack.c.l.b16 %v259
      %v370 = vunpack.c.h.b16 %v259
      %v371 = vunpack.c.l.b16 %v260
      %v372 = vunpack.c.h.b16 %v260
      %v373 = vunpack.c.l.b16 %v261
      %v374 = vunpack.c.h.b16 %v261
      %v375 = vunpack.c.l.b16 %v262
      %v376 = vunpack.c.h.b16 %v262
      %v377 = vunpack.c.l.b16 %v263
      %v378 = vunpack.c.h.b16 %v263
      %v379 = vunpack.c.l.b16 %v264
      %v380 = vunpack.c.h.b16 %v264
      %v381 = vunpack.c.l.b16 %v265
      %v382 = vunpack.c.h.b16 %v265
      %v383 = vunpack.c.l.b16 %v266
      %v384 = vunpack.c.h.b16 %v266
      %v385 = vunpack.c.l.b16 %v267
      %v386 = vunpack.c.h.b16 %v267
      %v387 = vunpack.c.l.b16 %v268
      %v388 = vunpack.c.h.b16 %v268
      %v389 = vunpack.c.l.b16 %v269
      %v390 = vunpack.c.h.b16 %v269
      %v391 = vpack.c.b16 %v329, %v327
      %v392 = vpack.c.b16 %v330, %v328
      %v393 = vpack.c.b16 %v333, %v331
      %v394 = vpack.c.b16 %v334, %v332
      %v395 = vpack.c.b16 %v337, %v335
      %v396 = vpack.c.b16 %v338, %v336
      %v397 = vpack.c.b16 %v341, %v339
      %v398 = vpack.c.b16 %v342, %v340
      %v399 = vpack.c.b16 %v345, %v343
      %v400 = vpack.c.b16 %v346, %v344
      %v401 = vpack.c.b16 %v349, %v347
      %v402 = vpack.c.b16 %v350, %v348
      %v403 = vpack.c.b16 %v353, %v351
      %v404 = vpack.c.b16 %v354, %v352
      %v405 = vpack.c.b16 %v357, %v355
      %v406 = vpack.c.b16 %v358, %v356
      %v407 = vpack.c.b16 %v361, %v359
      %v408 = vpack.c.b16 %v362, %v360
      %v409 = vpack.c.b16 %v365, %v363
      %v410 = vpack.c.b16 %v366, %v364
      %v411 = vpack.c.b16 %v369, %v367
      %v412 = vpack.c.b16 %v370, %v368
      %v413 = vpack.c.b16 %v373, %v371
      %v414 = vpack.c.b16 %v374, %v372
      %v415 = vpack.c.b16 %v377, %v375
      %v416 = vpack.c.b16 %v378, %v376
      %v417 = vpack.c.b16 %v381, %v379
      %v418 = vpack.c.b16 %v382, %v380
      %v419 = vpack.c.b16 %v385, %v383
      %v420 = vpack.c.b16 %v386, %v384
      %v421 = vpack.c.b16 %v389, %v387
      %v422 = vpack.c.b16 %v390, %v388
      %v464 = vunpack.c.l.b16 %v270
      %v465 = vunpack.c.l.b16 %v271
      %v466 = vunpack.c.l.b16 %v272
      %v467 = vunpack.c.l.b16 %v273
      %v468 = vunpack.c.l.b16 %v274
      %v469 = vunpack.c.l.b16 %v275
      %v470 = vunpack.c.l.b16 %v276
      %v471 = vunpack.c.l.b16 %v277
      %v472 = vunpack.c.l.b16 %v278
      %v473 = vunpack.c.l.b16 %v279
      %v474 = vunpack.c.l.b16 %v280
      %v475 = vunpack.c.l.b16 %v281
      %v476 = vunpack.c.l.b16 %v282
      %v477 = vunpack.c.l.b16 %v283
      %v478 = vunpack.c.l.b16 %v284
      %v479 = vunpack.c.l.b16 %v285
      %v480 = vunpack.c.l.b16 %v286
      %v481 = vunpack.c.l.b16 %v287
      %v482 = vunpack.c.l.b16 %v288
      %v483 = vunpack.c.l.b16 %v289
      %v484 = vunpack.c.l.b16 %v290
      %v485 = vunpack.c.l.b16 %v291
      %v486 = vunpack.c.l.b16 %v292
      %v487 = vunpack.c.l.b16 %v293
      %v488 = vunpack.c.l.b16 %v294
      %v489 = vpack.c.b16 %v465, %v464
      %v490 = vpack.c.b16 %v467, %v466
      %v491 = vpack.c.b16 %v469, %v468
      %v492 = vpack.c.b16 %v471, %v470
      %v493 = vpack.c.b16 %v473, %v472
      %v494 = vpack.c.b16 %v475, %v474
      %v495 = vpack.c.b16 %v477, %v476
      %v496 = vpack.c.b16 %v479, %v478
      %v497 = vpack.c.b16 %v481, %v480
      %v498 = vpack.c.b16 %v483, %v482
      %v499 = vpack.c.b16 %v485, %v484
      %v500 = vpack.c.b16 %v487, %v486
      %v501 = vpack.c.b16 %v488, %v488
      %vm514 = vcmask 588800
      %v516 = vsel %vm514, %v392, 0
      %v519 = vsel %vm514, %v394, 0
      %v522 = vsel %vm514, %v396, 0
      %v525 = vsel %vm514, %v398, 0
      %v528 = vsel %vm514, %v400, 0
      %v531 = vsel %vm514, %v402, 0
      %v534 = vsel %vm514, %v404, 0
      %v537 = vsel %vm514, %v406, 0
      %v540 = vsel %vm514, %v408, 0
      %v543 = vsel %vm514, %v410, 0
      %v546 = vsel %vm514, %v412, 0
      %v549 = vsel %vm514, %v414, 0
      %v552 = vsel %vm514, %v416, 0
      %v555 = vsel %vm514, %v418, 0
      %v558 = vsel %vm514, %v420, 0
      %v561 = vsel %vm514, %v422, 0
      %vm563 = vcmask 1043456
      %v565 = vsel %vm563, %v501, 0
      %567 = vmatpush.bf16.msra.mxu0 %v496
      %568 = vmatpush.bf16.msra.mxu0 %v495
      %569 = vmatpush.bf16.msra.mxu0 %v494
      %570 = vmatpush.bf16.msra.mxu0 %v493
      %571 = vmatpush.bf16.msra.mxu0 %v492
      %572 = vmatpush.bf16.msra.mxu0 %v491
      %573 = vmatpush.bf16.msra.mxu0 %v490
      %574 = vmatpush.bf16.msra.mxu0 %v489
      %575 = vmatmul.bf16.gmra.mxu0 %v391
      %v576 = vpop.f32.mrf.mxu0
      %v577 = vadd.f32 0.0, %v576
      %v578 = vpop.f32.mrf.mxu0
      %v579 = vadd.f32 0.0, %v578
      %580 = vmatmul.bf16.gmra.mxu0 %v393
      %v581 = vpop.f32.mrf.mxu0
      %v582 = vadd.f32 0.0, %v581
      %v583 = vpop.f32.mrf.mxu0
      %v584 = vadd.f32 0.0, %v583
      %585 = vmatmul.bf16.gmra.mxu0 %v395
      %v586 = vpop.f32.mrf.mxu0
      %v587 = vadd.f32 0.0, %v586
      %v588 = vpop.f32.mrf.mxu0
      %v589 = vadd.f32 0.0, %v588
      %590 = vmatmul.bf16.gmra.mxu0 %v397
      %v591 = vpop.f32.mrf.mxu0
      %v592 = vadd.f32 0.0, %v591
      %v593 = vpop.f32.mrf.mxu0
      %v594 = vadd.f32 0.0, %v593
      %595 = vmatmul.bf16.gmra.mxu0 %v399
      %v596 = vpop.f32.mrf.mxu0
      %v597 = vadd.f32 0.0, %v596
      %v598 = vpop.f32.mrf.mxu0
      %v599 = vadd.f32 0.0, %v598
      %600 = vmatmul.bf16.gmra.mxu0 %v401
      %v601 = vpop.f32.mrf.mxu0
      %v602 = vadd.f32 0.0, %v601
      %v603 = vpop.f32.mrf.mxu0
      %v604 = vadd.f32 0.0, %v603
      %605 = vmatmul.bf16.gmra.mxu0 %v403
      %v606 = vpop.f32.mrf.mxu0
      %v607 = vadd.f32 0.0, %v606
      %v608 = vpop.f32.mrf.mxu0
      %v609 = vadd.f32 0.0, %v608
      %610 = vmatmul.bf16.gmra.mxu0 %v405
      %v611 = vpop.f32.mrf.mxu0
      %v612 = vadd.f32 0.0, %v611
      %v613 = vpop.f32.mrf.mxu0
      %v614 = vadd.f32 0.0, %v613
      %615 = vmatmul.bf16.gmra.mxu0 %v407
      %v616 = vpop.f32.mrf.mxu0
      %v617 = vadd.f32 0.0, %v616
      %v618 = vpop.f32.mrf.mxu0
      %v619 = vadd.f32 0.0, %v618
      %620 = vmatmul.bf16.gmra.mxu0 %v409
      %v621 = vpop.f32.mrf.mxu0
      %v622 = vadd.f32 0.0, %v621
      %v623 = vpop.f32.mrf.mxu0
      %v624 = vadd.f32 0.0, %v623
      %625 = vmatmul.bf16.gmra.mxu0 %v411
      %v626 = vpop.f32.mrf.mxu0
      %v627 = vadd.f32 0.0, %v626
      %v628 = vpop.f32.mrf.mxu0
      %v629 = vadd.f32 0.0, %v628
      %630 = vmatmul.bf16.gmra.mxu0 %v413
      %v631 = vpop.f32.mrf.mxu0
      %v632 = vadd.f32 0.0, %v631
      %v633 = vpop.f32.mrf.mxu0
      %v634 = vadd.f32 0.0, %v633
      %635 = vmatmul.bf16.gmra.mxu0 %v415
      %v636 = vpop.f32.mrf.mxu0
      %v637 = vadd.f32 0.0, %v636
      %v638 = vpop.f32.mrf.mxu0
      %v639 = vadd.f32 0.0, %v638
      %640 = vmatmul.bf16.gmra.mxu0 %v417
      %v641 = vpop.f32.mrf.mxu0
      %v642 = vadd.f32 0.0, %v641
      %v643 = vpop.f32.mrf.mxu0
      %v644 = vadd.f32 0.0, %v643
      %645 = vmatmul.bf16.gmra.mxu0 %v419
      %v646 = vpop.f32.mrf.mxu0
      %v647 = vadd.f32 0.0, %v646
      %v648 = vpop.f32.mrf.mxu0
      %v649 = vadd.f32 0.0, %v648
      %650 = vmatmul.bf16.gmra.mxu0 %v421
      %v651 = vpop.f32.mrf.mxu0
      %v652 = vadd.f32 0.0, %v651
      %v653 = vpop.f32.mrf.mxu0
      %v654 = vadd.f32 0.0, %v653
      %655 = vdwg.mxu0
      %656 = vmatpush.bf16.msra.mxu0 0
      %657 = vmatpush.bf16.msra.mxu0 0
      %658 = vmatpush.bf16.msra.mxu0 0
      %659 = vmatpush.bf16.msra.mxu0 %v565
      %660 = vmatpush.bf16.msra.mxu0 %v500
      %661 = vmatpush.bf16.msra.mxu0 %v499
      %662 = vmatpush.bf16.msra.mxu0 %v498
      %663 = vmatpush.bf16.msra.mxu0 %v497
      %664 = vmatmul.bf16.gmra.mxu0 %v516
      %v665 = vpop.f32.mrf.mxu0
      %v666 = vadd.f32 %v577, %v665
      %v667 = vpop.f32.mrf.mxu0
      %v668 = vadd.f32 %v579, %v667
      %669 = vmatmul.bf16.gmra.mxu0 %v519
      %v670 = vpop.f32.mrf.mxu0
      %v671 = vadd.f32 %v582, %v670
      %v672 = vpop.f32.mrf.mxu0
      %v673 = vadd.f32 %v584, %v672
      %674 = vmatmul.bf16.gmra.mxu0 %v522
      %v675 = vpop.f32.mrf.mxu0
      %v676 = vadd.f32 %v587, %v675
      %v677 = vpop.f32.mrf.mxu0
      %v678 = vadd.f32 %v589, %v677
      %679 = vmatmul.bf16.gmra.mxu0 %v525
      %v680 = vpop.f32.mrf.mxu0
      %v681 = vadd.f32 %v592, %v680
      %v682 = vpop.f32.mrf.mxu0
      %v683 = vadd.f32 %v594, %v682
      %684 = vmatmul.bf16.gmra.mxu0 %v528
      %v685 = vpop.f32.mrf.mxu0
      %v686 = vadd.f32 %v597, %v685
      %v687 = vpop.f32.mrf.mxu0
      %v688 = vadd.f32 %v599, %v687
      %689 = vmatmul.bf16.gmra.mxu0 %v531
      %v690 = vpop.f32.mrf.mxu0
      %v691 = vadd.f32 %v602, %v690
      %v692 = vpop.f32.mrf.mxu0
      %v693 = vadd.f32 %v604, %v692
      %694 = vmatmul.bf16.gmra.mxu0 %v534
      %v695 = vpop.f32.mrf.mxu0
      %v696 = vadd.f32 %v607, %v695
      %v697 = vpop.f32.mrf.mxu0
      %v698 = vadd.f32 %v609, %v697
      %699 = vmatmul.bf16.gmra.mxu0 %v537
      %v700 = vpop.f32.mrf.mxu0
      %v701 = vadd.f32 %v612, %v700
      %v702 = vpop.f32.mrf.mxu0
      %v703 = vadd.f32 %v614, %v702
      %704 = vmatmul.bf16.gmra.mxu0 %v540
      %v705 = vpop.f32.mrf.mxu0
      %v706 = vadd.f32 %v617, %v705
      %v707 = vpop.f32.mrf.mxu0
      %v708 = vadd.f32 %v619, %v707
      %709 = vmatmul.bf16.gmra.mxu0 %v543
      %v710 = vpop.f32.mrf.mxu0
      %v711 = vadd.f32 %v622, %v710
      %v712 = vpop.f32.mrf.mxu0
      %v713 = vadd.f32 %v624, %v712
      %714 = vmatmul.bf16.gmra.mxu0 %v546
      %v715 = vpop.f32.mrf.mxu0
      %v716 = vadd.f32 %v627, %v715
      %v717 = vpop.f32.mrf.mxu0
      %v718 = vadd.f32 %v629, %v717
      %719 = vmatmul.bf16.gmra.mxu0 %v549
      %v720 = vpop.f32.mrf.mxu0
      %v721 = vadd.f32 %v632, %v720
      %v722 = vpop.f32.mrf.mxu0
      %v723 = vadd.f32 %v634, %v722
      %724 = vmatmul.bf16.gmra.mxu0 %v552
      %v725 = vpop.f32.mrf.mxu0
      %v726 = vadd.f32 %v637, %v725
      %v727 = vpop.f32.mrf.mxu0
      %v728 = vadd.f32 %v639, %v727
      %729 = vmatmul.bf16.gmra.mxu0 %v555
      %v730 = vpop.f32.mrf.mxu0
      %v731 = vadd.f32 %v642, %v730
      %v732 = vpop.f32.mrf.mxu0
      %v733 = vadd.f32 %v644, %v732
      %734 = vmatmul.bf16.gmra.mxu0 %v558
      %v735 = vpop.f32.mrf.mxu0
      %v736 = vadd.f32 %v647, %v735
      %v737 = vpop.f32.mrf.mxu0
      %v738 = vadd.f32 %v649, %v737
      %739 = vmatmul.bf16.gmra.mxu0 %v561
      %v740 = vpop.f32.mrf.mxu0
      %v741 = vadd.f32 %v652, %v740
      %v742 = vpop.f32.mrf.mxu0
      %v743 = vadd.f32 %v654, %v742
      %744 = vdwg.mxu0
      %v745 = vld [vmem:[%s225] sm:$0xff]
      %v746 = vld [vmem:[%s225 + $0x8] sm:$0xff]
      %v747 = vld [vmem:[%s225 + $0x10] sm:$0xff]
      %v748 = vld [vmem:[%s225 + $0x18] sm:$0xff]
      %v749 = vld [vmem:[%s225 + $0x20] sm:$0xff]
      %v750 = vld [vmem:[%s225 + $0x28] sm:$0xff]
      %v751 = vld [vmem:[%s225 + $0x30] sm:$0xff]
      %v752 = vld [vmem:[%s225 + $0x38] sm:$0xff]
      %v753 = vld [vmem:[%s225 + $0x40] sm:$0xff]
      %v754 = vld [vmem:[%s225 + $0x48] sm:$0xff]
      %v755 = vld [vmem:[%s225 + $0x50] sm:$0xff]
      %v756 = vld [vmem:[%s225 + $0x58] sm:$0xff]
      %v757 = vld [vmem:[%s225 + $0x60] sm:$0xff]
      %v758 = vld [vmem:[%s225 + $0x68] sm:$0xff]
      %v759 = vld [vmem:[%s225 + $0x70] sm:$0xff]
      %v760 = vld [vmem:[%s225 + $0x78] sm:$0xff]
      %v761 = vld [vmem:[%s225 + $0x80] sm:$0xff]
      %v762 = vld [vmem:[%s225 + $0x88] sm:$0xff]
      %v763 = vld [vmem:[%s225 + $0x90] sm:$0xff]
      %v764 = vld [vmem:[%s225 + $0x98] sm:$0xff]
      %v765 = vld [vmem:[%s225 + $0xa0] sm:$0xff]
      %v766 = vld [vmem:[%s225 + $0xa8] sm:$0xff]
      %v767 = vld [vmem:[%s225 + $0xb0] sm:$0xff]
      %v768 = vld [vmem:[%s225 + $0xb8] sm:$0xff]
      %v769 = vld [vmem:[%s225 + $0xc0] sm:$0xff]
      %v770 = vld [vmem:[%s225 + $0xc8] sm:$0xff]
      %v771 = vld [vmem:[%s225 + $0xd0] sm:$0xff]
      %v772 = vld [vmem:[%s225 + $0xd8] sm:$0xff]
      %v773 = vld [vmem:[%s225 + $0xe0] sm:$0xff]
      %v774 = vld [vmem:[%s225 + $0xe8] sm:$0xff]
      %v775 = vld [vmem:[%s225 + $0xf0] sm:$0xff]
      %v776 = vld [vmem:[%s225 + $0xf8] sm:$0xff]
      %778 = vset.pattern.permute.xlu0 0
      %779 = vperm.xlu0 %778, %v745
      %v780 = vpop.permute.xlu0 %779
      %783 = vset.pattern.permute.xlu0 0
      %784 = vperm.xlu0 %783, %v746
      %v785 = vpop.permute.xlu0 %784
      %788 = vset.pattern.permute.xlu0 0
      %789 = vperm.xlu0 %788, %v747
      %v790 = vpop.permute.xlu0 %789
      %793 = vset.pattern.permute.xlu0 0
      %794 = vperm.xlu0 %793, %v748
      %v795 = vpop.permute.xlu0 %794
      %798 = vset.pattern.permute.xlu0 0
      %799 = vperm.xlu0 %798, %v749
      %v800 = vpop.permute.xlu0 %799
      %803 = vset.pattern.permute.xlu0 0
      %804 = vperm.xlu0 %803, %v750
      %v805 = vpop.permute.xlu0 %804
      %808 = vset.pattern.permute.xlu0 0
      %809 = vperm.xlu0 %808, %v751
      %v810 = vpop.permute.xlu0 %809
      %813 = vset.pattern.permute.xlu0 0
      %814 = vperm.xlu0 %813, %v752
      %v815 = vpop.permute.xlu0 %814
      %818 = vset.pattern.permute.xlu0 0
      %819 = vperm.xlu0 %818, %v753
      %v820 = vpop.permute.xlu0 %819
      %823 = vset.pattern.permute.xlu0 0
      %824 = vperm.xlu0 %823, %v754
      %v825 = vpop.permute.xlu0 %824
      %828 = vset.pattern.permute.xlu0 0
      %829 = vperm.xlu0 %828, %v755
      %v830 = vpop.permute.xlu0 %829
      %833 = vset.pattern.permute.xlu0 0
      %834 = vperm.xlu0 %833, %v756
      %v835 = vpop.permute.xlu0 %834
      %838 = vset.pattern.permute.xlu0 0
      %839 = vperm.xlu0 %838, %v757
      %v840 = vpop.permute.xlu0 %839
      %843 = vset.pattern.permute.xlu0 0
      %844 = vperm.xlu0 %843, %v758
      %v845 = vpop.permute.xlu0 %844
      %848 = vset.pattern.permute.xlu0 0
      %849 = vperm.xlu0 %848, %v759
      %v850 = vpop.permute.xlu0 %849
      %853 = vset.pattern.permute.xlu0 0
      %854 = vperm.xlu0 %853, %v760
      %v855 = vpop.permute.xlu0 %854
      %858 = vset.pattern.permute.xlu0 0
      %859 = vperm.xlu0 %858, %v761
      %v860 = vpop.permute.xlu0 %859
      %863 = vset.pattern.permute.xlu0 0
      %864 = vperm.xlu0 %863, %v762
      %v865 = vpop.permute.xlu0 %864
      %868 = vset.pattern.permute.xlu0 0
      %869 = vperm.xlu0 %868, %v763
      %v870 = vpop.permute.xlu0 %869
      %873 = vset.pattern.permute.xlu0 0
      %874 = vperm.xlu0 %873, %v764
      %v875 = vpop.permute.xlu0 %874
      %878 = vset.pattern.permute.xlu0 0
      %879 = vperm.xlu0 %878, %v765
      %v880 = vpop.permute.xlu0 %879
      %883 = vset.pattern.permute.xlu0 0
      %884 = vperm.xlu0 %883, %v766
      %v885 = vpop.permute.xlu0 %884
      %888 = vset.pattern.permute.xlu0 0
      %889 = vperm.xlu0 %888, %v767
      %v890 = vpop.permute.xlu0 %889
      %893 = vset.pattern.permute.xlu0 0
      %894 = vperm.xlu0 %893, %v768
      %v895 = vpop.permute.xlu0 %894
      %898 = vset.pattern.permute.xlu0 0
      %899 = vperm.xlu0 %898, %v769
      %v900 = vpop.permute.xlu0 %899
      %903 = vset.pattern.permute.xlu0 0
      %904 = vperm.xlu0 %903, %v770
      %v905 = vpop.permute.xlu0 %904
      %908 = vset.pattern.permute.xlu0 0
      %909 = vperm.xlu0 %908, %v771
      %v910 = vpop.permute.xlu0 %909
      %913 = vset.pattern.permute.xlu0 0
      %914 = vperm.xlu0 %913, %v772
      %v915 = vpop.permute.xlu0 %914
      %918 = vset.pattern.permute.xlu0 0
      %919 = vperm.xlu0 %918, %v773
      %v920 = vpop.permute.xlu0 %919
      %923 = vset.pattern.permute.xlu0 0
      %924 = vperm.xlu0 %923, %v774
      %v925 = vpop.permute.xlu0 %924
      %928 = vset.pattern.permute.xlu0 0
      %929 = vperm.xlu0 %928, %v775
      %v930 = vpop.permute.xlu0 %929
      %933 = vset.pattern.permute.xlu0 0
      %934 = vperm.xlu0 %933, %v776
      %v935 = vpop.permute.xlu0 %934
      %v937 = vmul.f32 %v666, %v780
      %v938 = vmul.f32 %v668, %v785
      %v939 = vmul.f32 %v671, %v790
      %v940 = vmul.f32 %v673, %v795
      %v941 = vmul.f32 %v676, %v800
      %v942 = vmul.f32 %v678, %v805
      %v943 = vmul.f32 %v681, %v810
      %v944 = vmul.f32 %v683, %v815
      %v945 = vmul.f32 %v686, %v820
      %v946 = vmul.f32 %v688, %v825
      %v947 = vmul.f32 %v691, %v830
      %v948 = vmul.f32 %v693, %v835
      %v949 = vmul.f32 %v696, %v840
      %v950 = vmul.f32 %v698, %v845
      %v951 = vmul.f32 %v701, %v850
      %v952 = vmul.f32 %v703, %v855
      %v953 = vmul.f32 %v706, %v860
      %v954 = vmul.f32 %v708, %v865
      %v955 = vmul.f32 %v711, %v870
      %v956 = vmul.f32 %v713, %v875
      %v957 = vmul.f32 %v716, %v880
      %v958 = vmul.f32 %v718, %v885
      %v959 = vmul.f32 %v721, %v890
      %v960 = vmul.f32 %v723, %v895
      %v961 = vmul.f32 %v726, %v900
      %v962 = vmul.f32 %v728, %v905
      %v963 = vmul.f32 %v731, %v910
      %v964 = vmul.f32 %v733, %v915
      %v965 = vmul.f32 %v736, %v920
      %v966 = vmul.f32 %v738, %v925
      %v967 = vmul.f32 %v741, %v930
      %v968 = vmul.f32 %v743, %v935
      %969 = vst [vmem:[%s231] sm:$0xff] %v937
      %970 = vst [vmem:[%s231 + $0x8] sm:$0xff] %v938
      %971 = vst [vmem:[%s231 + $0x10] sm:$0xff] %v939
      %972 = vst [vmem:[%s231 + $0x18] sm:$0xff] %v940
      %973 = vst [vmem:[%s231 + $0x20] sm:$0xff] %v941
      %974 = vst [vmem:[%s231 + $0x28] sm:$0xff] %v942
      %975 = vst [vmem:[%s231 + $0x30] sm:$0xff] %v943
      %976 = vst [vmem:[%s231 + $0x38] sm:$0xff] %v944
      %977 = vst [vmem:[%s231 + $0x40] sm:$0xff] %v945
      %978 = vst [vmem:[%s231 + $0x48] sm:$0xff] %v946
      %979 = vst [vmem:[%s231 + $0x50] sm:$0xff] %v947
      %980 = vst [vmem:[%s231 + $0x58] sm:$0xff] %v948
      %981 = vst [vmem:[%s231 + $0x60] sm:$0xff] %v949
      %982 = vst [vmem:[%s231 + $0x68] sm:$0xff] %v950
      %983 = vst [vmem:[%s231 + $0x70] sm:$0xff] %v951
      %984 = vst [vmem:[%s231 + $0x78] sm:$0xff] %v952
      %985 = vst [vmem:[%s231 + $0x80] sm:$0xff] %v953
      %986 = vst [vmem:[%s231 + $0x88] sm:$0xff] %v954
      %987 = vst [vmem:[%s231 + $0x90] sm:$0xff] %v955
      %988 = vst [vmem:[%s231 + $0x98] sm:$0xff] %v956
      %989 = vst [vmem:[%s231 + $0xa0] sm:$0xff] %v957
      %990 = vst [vmem:[%s231 + $0xa8] sm:$0xff] %v958
      %991 = vst [vmem:[%s231 + $0xb0] sm:$0xff] %v959
      %992 = vst [vmem:[%s231 + $0xb8] sm:$0xff] %v960
      %993 = vst [vmem:[%s231 + $0xc0] sm:$0xff] %v961
      %994 = vst [vmem:[%s231 + $0xc8] sm:$0xff] %v962
      %995 = vst [vmem:[%s231 + $0xd0] sm:$0xff] %v963
      %996 = vst [vmem:[%s231 + $0xd8] sm:$0xff] %v964
      %997 = vst [vmem:[%s231 + $0xe0] sm:$0xff] %v965
      %998 = vst [vmem:[%s231 + $0xe8] sm:$0xff] %v966
      %999 = vst [vmem:[%s231 + $0xf0] sm:$0xff] %v967
      %1000 = vst [vmem:[%s231 + $0xf8] sm:$0xff] %v968
      %v1001 = vadd.f32 %v937, %v938
      %v1002 = vadd.f32 %v1001, %v939
      %v1003 = vadd.f32 %v1002, %v940
      %v1004 = vadd.f32 %v1003, %v941
      %v1005 = vadd.f32 %v1004, %v942
      %v1006 = vadd.f32 %v1005, %v943
      %v1007 = vadd.f32 %v1006, %v944
      %v1008 = vadd.f32 %v1007, %v945
      %v1009 = vadd.f32 %v1008, %v946
      %v1010 = vadd.f32 %v1009, %v947
      %v1011 = vadd.f32 %v1010, %v948
      %v1012 = vadd.f32 %v1011, %v949
      %v1013 = vadd.f32 %v1012, %v950
      %v1014 = vadd.f32 %v1013, %v951
      %v1015 = vadd.f32 %v1014, %v952
      %v1016 = vadd.f32 %v1015, %v953
      %v1017 = vadd.f32 %v1016, %v954
      %v1018 = vadd.f32 %v1017, %v955
      %v1019 = vadd.f32 %v1018, %v956
      %v1020 = vadd.f32 %v1019, %v957
      %v1021 = vadd.f32 %v1020, %v958
      %v1022 = vadd.f32 %v1021, %v959
      %v1023 = vadd.f32 %v1022, %v960
      %v1024 = vadd.f32 %v1023, %v961
      %v1025 = vadd.f32 %v1024, %v962
      %v1026 = vadd.f32 %v1025, %v963
      %v1027 = vadd.f32 %v1026, %v964
      %v1028 = vadd.f32 %v1027, %v965
      %v1029 = vadd.f32 %v1028, %v966
      %v1030 = vadd.f32 %v1029, %v967
      %v1031 = vadd.f32 %v1030, %v968
      %v1032 = vrot.slane %v1031, 4
      %v1033 = vadd.f32 %v1031, %v1032
      %v1034 = vrot.slane %v1033, 2
      %v1035 = vadd.f32 %v1033, %v1034
      %v1036 = vrot.slane %v1035, 1
      %v1037 = vadd.f32 %v1035, %v1036
      %v1038 = vmul.f32 %v1037, 0.00390625
      %v1039 = vsub.f32 %v937, %v1038
      %v1040 = vsub.f32 %v938, %v1038
      %v1041 = vsub.f32 %v939, %v1038
      %v1042 = vsub.f32 %v940, %v1038
      %v1043 = vsub.f32 %v941, %v1038
      %v1044 = vsub.f32 %v942, %v1038
      %v1045 = vsub.f32 %v943, %v1038
      %v1046 = vsub.f32 %v944, %v1038
      %v1047 = vsub.f32 %v945, %v1038
      %v1048 = vsub.f32 %v946, %v1038
      %v1049 = vsub.f32 %v947, %v1038
      %v1050 = vsub.f32 %v948, %v1038
      %v1051 = vsub.f32 %v949, %v1038
      %v1052 = vsub.f32 %v950, %v1038
      %v1053 = vsub.f32 %v951, %v1038
      %v1054 = vsub.f32 %v952, %v1038
      %v1055 = vsub.f32 %v953, %v1038
      %v1056 = vsub.f32 %v954, %v1038
      %v1057 = vsub.f32 %v955, %v1038
      %v1058 = vsub.f32 %v956, %v1038
      %v1059 = vsub.f32 %v957, %v1038
      %v1060 = vsub.f32 %v958, %v1038
      %v1061 = vsub.f32 %v959, %v1038
      %v1062 = vsub.f32 %v960, %v1038
      %v1063 = vsub.f32 %v961, %v1038
      %v1064 = vsub.f32 %v962, %v1038
      %v1065 = vsub.f32 %v963, %v1038
      %v1066 = vsub.f32 %v964, %v1038
      %v1067 = vsub.f32 %v965, %v1038
      %v1068 = vsub.f32 %v966, %v1038
      %v1069 = vsub.f32 %v967, %v1038
      %v1070 = vsub.f32 %v968, %v1038
      %v1071 = vmul.f32 %v1039, %v1039
      %v1072 = vmul.f32 %v1040, %v1040
      %v1073 = vmul.f32 %v1041, %v1041
      %v1074 = vmul.f32 %v1042, %v1042
      %v1075 = vmul.f32 %v1043, %v1043
      %v1076 = vmul.f32 %v1044, %v1044
      %v1077 = vmul.f32 %v1045, %v1045
      %v1078 = vmul.f32 %v1046, %v1046
      %v1079 = vmul.f32 %v1047, %v1047
      %v1080 = vmul.f32 %v1048, %v1048
      %v1081 = vmul.f32 %v1049, %v1049
      %v1082 = vmul.f32 %v1050, %v1050
      %v1083 = vmul.f32 %v1051, %v1051
      %v1084 = vmul.f32 %v1052, %v1052
      %v1085 = vmul.f32 %v1053, %v1053
      %v1086 = vmul.f32 %v1054, %v1054
      %v1087 = vmul.f32 %v1055, %v1055
      %v1088 = vmul.f32 %v1056, %v1056
      %v1089 = vmul.f32 %v1057, %v1057
      %v1090 = vmul.f32 %v1058, %v1058
      %v1091 = vmul.f32 %v1059, %v1059
      %v1092 = vmul.f32 %v1060, %v1060
      %v1093 = vmul.f32 %v1061, %v1061
      %v1094 = vmul.f32 %v1062, %v1062
      %v1095 = vmul.f32 %v1063, %v1063
      %v1096 = vmul.f32 %v1064, %v1064
      %v1097 = vmul.f32 %v1065, %v1065
      %v1098 = vmul.f32 %v1066, %v1066
      %v1099 = vmul.f32 %v1067, %v1067
      %v1100 = vmul.f32 %v1068, %v1068
      %v1101 = vmul.f32 %v1069, %v1069
      %v1102 = vmul.f32 %v1070, %v1070
      %v1103 = vadd.f32 %v1071, %v1072
      %v1104 = vadd.f32 %v1103, %v1073
      %v1105 = vadd.f32 %v1104, %v1074
      %v1106 = vadd.f32 %v1105, %v1075
      %v1107 = vadd.f32 %v1106, %v1076
      %v1108 = vadd.f32 %v1107, %v1077
      %v1109 = vadd.f32 %v1108, %v1078
      %v1110 = vadd.f32 %v1109, %v1079
      %v1111 = vadd.f32 %v1110, %v1080
      %v1112 = vadd.f32 %v1111, %v1081
      %v1113 = vadd.f32 %v1112, %v1082
      %v1114 = vadd.f32 %v1113, %v1083
      %v1115 = vadd.f32 %v1114, %v1084
      %v1116 = vadd.f32 %v1115, %v1085
      %v1117 = vadd.f32 %v1116, %v1086
      %v1118 = vadd.f32 %v1117, %v1087
      %v1119 = vadd.f32 %v1118, %v1088
      %v1120 = vadd.f32 %v1119, %v1089
      %v1121 = vadd.f32 %v1120, %v1090
      %v1122 = vadd.f32 %v1121, %v1091
      %v1123 = vadd.f32 %v1122, %v1092
      %v1124 = vadd.f32 %v1123, %v1093
      %v1125 = vadd.f32 %v1124, %v1094
      %v1126 = vadd.f32 %v1125, %v1095
      %v1127 = vadd.f32 %v1126, %v1096
      %v1128 = vadd.f32 %v1127, %v1097
      %v1129 = vadd.f32 %v1128, %v1098
      %v1130 = vadd.f32 %v1129, %v1099
      %v1131 = vadd.f32 %v1130, %v1100
      %v1132 = vadd.f32 %v1131, %v1101
      %v1133 = vadd.f32 %v1132, %v1102
      %v1134 = vrot.slane %v1133, 4
      %v1135 = vadd.f32 %v1133, %v1134
      %v1136 = vrot.slane %v1135, 2
      %v1137 = vadd.f32 %v1135, %v1136
      %v1138 = vrot.slane %v1137, 1
      %v1139 = vadd.f32 %v1137, %v1138
      %vm1140 = vcmask 1040384
      %v1141 = vsel %vm1140, %v1037, %v1139
      %1142 = vst [vmem:[%s236] sm:$0x3] %v1141
      %s1143 = smul.u32 32, %s16
      %p1144 = scmp.lt.s32.totalorder %s1143, 63
      %s1145 = scalar_select %p1144, %s1143, 63
      %s1146 = smul.addr %s1145, 8
      %s1147 = scalar_lea.vmem %s3, %s1146
      %p1148 = scmp.lt.s32.totalorder %s16, 1
      %s1149 = scalar_select %p1148, %s16, 1
      %s1150 = smul.addr %s1149, 2
      %s1151 = scalar_lea.vmem %s4, %s1150
      // Predicated region
      $region33: #{masked_resnet_forward.18} parent=31 // pred_check
        %p1152 = pneg %p107
      $region34: #{masked_resnet_forward.18} parent=31 // pred_check_branch
        %1154 = sbr.rel (%p1152) target = $region36
      $region35: #{masked_resnet_forward.18} parent=31 // pred_region
        %s1155 = smul.u32 32, %s16
      $region36: #{masked_resnet_forward.18} parent=31 // pred_fallthru
        _
      // Predicated region
      $region37: #{masked_resnet_forward.18} parent=31 // pred_check
        %p1156 = pneg %p133
      $region38: #{masked_resnet_forward.18} parent=31 // pred_check_branch
        %1158 = sbr.rel (%p1156) target = $region40
      $region39: #{masked_resnet_forward.18} parent=31 // pred_region
        _
      $region40: #{masked_resnet_forward.18} parent=31 // pred_fallthru
        _
    $region32: #{masked_resnet_forward.18} parent=5 // pred_fallthru
      _
    %p1159 = scmp.le.s32.totalorder 2, %s11
    // Predicated region
    $region41: #{masked_resnet_forward.18} parent=5 // pred_check
      %p1160 = pneg %p1159
    $region42: #{masked_resnet_forward.18} parent=5 // pred_check_branch
      %1162 = sbr.rel (%p1160) target = $region44
    $region43: #{masked_resnet_forward.18} parent=5 // pred_region
      %s1163 = ssub.s32 %s11, 2
      // Predicated region
      $region45: #{masked_resnet_forward.18} parent=43 // pred_check
        %p1164 = pneg %p113
      $region46: #{masked_resnet_forward.18} parent=43 // pred_check_branch
        %1166 = sbr.rel (%p1164) target = $region48
      $region47: #{masked_resnet_forward.18} parent=43 // pred_region
        %s1167 = smul.u32 32, %s17
        %p1168 = scmp.lt.s32.totalorder %s1167, 63
        %s1169 = scalar_select %p1168, %s1167, 63
        %s1170 = smul.addr %s1169, 8
        %s1171 = scalar_lea.vmem %s3, %s1170
      $region48: #{masked_resnet_forward.18} parent=43 // pred_fallthru
        _
      // Predicated region
      $region49: #{masked_resnet_forward.18} parent=43 // pred_check
        %p1172 = pneg %p139
      $region50: #{masked_resnet_forward.18} parent=43 // pred_check_branch
        %1174 = sbr.rel (%p1172) target = $region52
      $region51: #{masked_resnet_forward.18} parent=43 // pred_region
        %p1175 = scmp.lt.s32.totalorder %s17, 1
        %s1176 = scalar_select %p1175, %s17, 1
        %s1177 = smul.addr %s1176, 2
        %s1178 = scalar_lea.vmem %s4, %s1177
      $region52: #{masked_resnet_forward.18} parent=43 // pred_fallthru
        _
    $region44: #{masked_resnet_forward.18} parent=5 // pred_fallthru
      _
  $region6: #{masked_resnet_forward.18} parent=0 // loop_footer
    %s15 = sadd.s32 1, %s11
  $region7: #{masked_resnet_forward.18} parent=0 // loop_footer_branch
    %10 = sbr.rel target = $region3
  $region8: #{masked_resnet_forward.18} parent=0 // loop_exit
    _

// kernel: masked_resnet_forward.20
$region0: #{masked_resnet_forward.20}
  #allocation0 [shape = 'u32[]', space=smem, size = 0x4, offset = 0x4, fixed_abs, tag = 'smem constant byte address 0x4 - core index']
  #allocation1 [shape = 'u32[72,128]{1,0:T(1,128)}', space=vmem, size = 0x9000, scoped, tag = 'internal scratch']
  %s0 = inlined_call_operand.vmem [shape: bf16[512,72], index: 0, kind: input, shape index: {}]
  %s1 = inlined_call_operand.vmem [shape: f32[512,1], index: 1, kind: input, shape index: {}]
  %s2 = inlined_call_operand.vmem [shape: bf16[72,128], index: 2, kind: input, shape index: {}]
  %s3 = inlined_call_operand.vmem [shape: f32[512,128], index: 3, kind: output, shape index: {0}]
  %s4 = inlined_call_operand.vmem [shape: f32[2,2,128], index: 4, kind: output, shape index: {1}]
  %5 = xla_tuple %s3, %s4
  %s6 = sld [smem:[#allocation0]]
  $region53: #{masked_resnet_forward.20} parent=0
    _
  %s8 = ssub.s32 1, %s6
  %s9 = scalar_select 0, %s8, %s6
  loop: start=0, step=1, limit=4
  $region2: #{masked_resnet_forward.20} parent=0 // loop_pre_header
    _
  $region3: #{masked_resnet_forward.20} parent=0 // loop_header
    %s11 = sphi 0, %s15
    %p12 = scmp.ge.s32.totalorder %s11, 4
    %s21 = sphi 0, %s23
    %s24 = sphi 0, %s21
    %s25 = sphi 0, %s24
    %s41 = sphi 0, %s25
    %s47 = sphi 0, %s49
    %s50 = sphi 0, %s47
    %s51 = sphi 0, %s50
    %s67 = sphi 0, %s51
    %s71 = sphi 0, %s71
    %s73 = sphi 0, %s71
    %s74 = sphi 0, %s73
    %s88 = sphi 0, %s74
    %s94 = sphi 0, %s96
    %s97 = sphi 0, %s94
    %s98 = sphi 0, %s97
    %s114 = sphi 0, %s98
    %s120 = sphi 0, %s122
    %s123 = sphi 0, %s120
    %s124 = sphi 0, %s123
    %s140 = sphi 0, %s124
  $region4: #{masked_resnet_forward.20} parent=0 // loop_header_branch
    %14 = sbr.rel (%p12) target = $region8
  $region5: #{masked_resnet_forward.20} parent=0 // loop_body
    %s16 = ssub.s32 %s11, 1
    %s17 = ssub.s32 %s11, 2
    %s18 = sadd.s32 %s11, 1
    %s19 = ssub.s32 %s11, %s18
    %p20 = scmp.eq.s32.totalorder %s19, 0
    %s22 = sadd.s32 %s21, 1
    %s23 = scalar_select %p20, %s21, %s22
    %p26 = pneg %p20
    %p27 = scmp.eq.s32.totalorder %s11, 1
    %p28 = por %p26, %p27
    %p29 = scmp.ne.s32.totalorder %s21, %s24
    %p30 = scmp.eq.s32.totalorder %s11, 0
    %p31 = por %p29, %p30
    %p32 = scmp.ne.s32.totalorder %s21, %s24
    %p33 = scmp.eq.s32.totalorder %s16, 1
    %p34 = por %p32, %p33
    %p35 = scmp.ne.s32.totalorder %s24, %s25
    %p36 = scmp.eq.s32.totalorder %s16, 0
    %p37 = por %p35, %p36
    %p38 = scmp.ne.s32.totalorder %s24, %s25
    %p39 = scmp.eq.s32.totalorder %s17, 1
    %p40 = por %p38, %p39
    %p42 = scmp.ne.s32.totalorder %s25, %s41
    %p43 = scmp.eq.s32.totalorder %s17, 0
    %p44 = por %p42, %p43
    %s45 = ssub.s32 %s11, %s18
    %p46 = scmp.eq.s32.totalorder %s45, 0
    %s48 = sadd.s32 %s47, 1
    %s49 = scalar_select %p46, %s47, %s48
    %p52 = pneg %p46
    %p53 = scmp.eq.s32.totalorder %s11, 1
    %p54 = por %p52, %p53
    %p55 = scmp.ne.s32.totalorder %s47, %s50
    %p56 = scmp.eq.s32.totalorder %s11, 0
    %p57 = por %p55, %p56
    %p58 = scmp.ne.s32.totalorder %s47, %s50
    %p59 = scmp.eq.s32.totalorder %s16, 1
    %p60 = por %p58, %p59
    %p61 = scmp.ne.s32.totalorder %s50, %s51
    %p62 = scmp.eq.s32.totalorder %s16, 0
    %p63 = por %p61, %p62
    %p64 = scmp.ne.s32.totalorder %s50, %s51
    %p65 = scmp.eq.s32.totalorder %s17, 1
    %p66 = por %p64, %p65
    %p68 = scmp.ne.s32.totalorder %s51, %s67
    %p69 = scmp.eq.s32.totalorder %s17, 0
    %p70 = por %p68, %p69
    %s72 = sadd.s32 %s71, 1
    %p75 = scmp.eq.s32.totalorder %s11, 1
    %p76 = scmp.ne.s32.totalorder %s71, %s73
    %p77 = scmp.eq.s32.totalorder %s11, 0
    %p78 = por %p76, %p77
    %p79 = scmp.ne.s32.totalorder %s71, %s73
    %p80 = scmp.eq.s32.totalorder %s16, 1
    %p81 = por %p79, %p80
    %p82 = scmp.ne.s32.totalorder %s73, %s74
    %p83 = scmp.eq.s32.totalorder %s16, 0
    %p84 = por %p82, %p83
    %p85 = scmp.ne.s32.totalorder %s73, %s74
    %p86 = scmp.eq.s32.totalorder %s17, 1
    %p87 = por %p85, %p86
    %p89 = scmp.ne.s32.totalorder %s74, %s88
    %p90 = scmp.eq.s32.totalorder %s17, 0
    %p91 = por %p89, %p90
    %s92 = ssub.s32 %s11, %s18
    %p93 = scmp.eq.s32.totalorder %s92, 0
    %s95 = sadd.s32 %s94, 1
    %s96 = scalar_select %p93, %s94, %s95
    %p99 = pneg %p93
    %p100 = scmp.eq.s32.totalorder %s11, 1
    %p101 = por %p99, %p100
    %p102 = scmp.ne.s32.totalorder %s94, %s97
    %p103 = scmp.eq.s32.totalorder %s11, 0
    %p104 = por %p102, %p103
    %p105 = scmp.ne.s32.totalorder %s94, %s97
    %p106 = scmp.eq.s32.totalorder %s16, 1
    %p107 = por %p105, %p106
    %p108 = scmp.ne.s32.totalorder %s97, %s98
    %p109 = scmp.eq.s32.totalorder %s16, 0
    %p110 = por %p108, %p109
    %p111 = scmp.ne.s32.totalorder %s97, %s98
    %p112 = scmp.eq.s32.totalorder %s17, 1
    %p113 = por %p111, %p112
    %p115 = scmp.ne.s32.totalorder %s98, %s114
    %p116 = scmp.eq.s32.totalorder %s17, 0
    %p117 = por %p115, %p116
    %s118 = ssub.s32 %s11, %s18
    %p119 = scmp.eq.s32.totalorder %s118, 0
    %s121 = sadd.s32 %s120, 1
    %s122 = scalar_select %p119, %s120, %s121
    %p125 = pneg %p119
    %p126 = scmp.eq.s32.totalorder %s11, 1
    %p127 = por %p125, %p126
    %p128 = scmp.ne.s32.totalorder %s120, %s123
    %p129 = scmp.eq.s32.totalorder %s11, 0
    %p130 = por %p128, %p129
    %p131 = scmp.ne.s32.totalorder %s120, %s123
    %p132 = scmp.eq.s32.totalorder %s16, 1
    %p133 = por %p131, %p132
    %p134 = scmp.ne.s32.totalorder %s123, %s124
    %p135 = scmp.eq.s32.totalorder %s16, 0
    %p136 = por %p134, %p135
    %p137 = scmp.ne.s32.totalorder %s123, %s124
    %p138 = scmp.eq.s32.totalorder %s17, 1
    %p139 = por %p137, %p138
    %p141 = scmp.ne.s32.totalorder %s124, %s140
    %p142 = scmp.eq.s32.totalorder %s17, 0
    %p143 = por %p141, %p142
    %p144 = scmp.le.s32.totalorder 1, %s11
    %p145 = scmp.lt.s32.totalorder %s11, 3
    %p146 = pnand %p144, %p145
    %p147 = pneg %p146
    // Predicated region
    $region9: #{masked_resnet_forward.20} parent=5 // pred_check
      _
    $region10: #{masked_resnet_forward.20} parent=5 // pred_check_branch
      %149 = sbr.rel (%p146) target = $region12
    $region11: #{masked_resnet_forward.20} parent=5 // pred_region
      %s150 = ssub.s32 %s11, 1
      // Predicated region
      $region13: #{masked_resnet_forward.20} parent=11 // pred_check
        %p151 = pneg %p84
      $region14: #{masked_resnet_forward.20} parent=11 // pred_check_branch
        %153 = sbr.rel (%p151) target = $region16
      $region15: #{masked_resnet_forward.20} parent=11 // pred_region
        _
      $region16: #{masked_resnet_forward.20} parent=11 // pred_fallthru
        _
    $region12: #{masked_resnet_forward.20} parent=5 // pred_fallthru
      _
    %p154 = scmp.lt.s32.totalorder %s11, 2
    // Predicated region
    $region17: #{masked_resnet_forward.20} parent=5 // pred_check
      %p155 = pneg %p154
    $region18: #{masked_resnet_forward.20} parent=5 // pred_check_branch
      %157 = sbr.rel (%p155) target = $region20
    $region19: #{masked_resnet_forward.20} parent=5 // pred_region
      // Predicated region
      $region21: #{masked_resnet_forward.20} parent=19 // pred_check
        %p158 = pneg %p31
      $region22: #{masked_resnet_forward.20} parent=19 // pred_check_branch
        %160 = sbr.rel (%p158) target = $region24
      $region23: #{masked_resnet_forward.20} parent=19 // pred_region
        %s161 = smul.u32 32, %s11
        %p162 = scmp.lt.s32.totalorder %s161, 63
        %s163 = scalar_select %p162, %s161, 63
        %s164 = smul.addr %s163, 4
        %s165 = scalar_lea.vmem %s0, %s164
        %s166 = smul.u32 32, %s11
      $region24: #{masked_resnet_forward.20} parent=19 // pred_fallthru
        _
      // Predicated region
      $region25: #{masked_resnet_forward.20} parent=19 // pred_check
        %p167 = pneg %p57
      $region26: #{masked_resnet_forward.20} parent=19 // pred_check_branch
        %169 = sbr.rel (%p167) target = $region28
      $region27: #{masked_resnet_forward.20} parent=19 // pred_region
        %s170 = smul.u32 32, %s11
        %p171 = scmp.lt.s32.totalorder %s170, 63
        %s172 = scalar_select %p171, %s170, 63
        %s173 = smul.addr %s172, 8
        %s174 = scalar_lea.vmem %s1, %s173
        %s175 = smul.u32 32, %s11
      $region28: #{masked_resnet_forward.20} parent=19 // pred_fallthru
        _
    $region20: #{masked_resnet_forward.20} parent=5 // pred_fallthru
      _
    %p176 = scmp.le.s32.totalorder 1, %s11
    %p177 = scmp.lt.s32.totalorder %s11, 3
    %p178 = pnand %p176, %p177
    %p179 = pneg %p178
    // Predicated region
    $region29: #{masked_resnet_forward.20} parent=5 // pred_check
      _
    $region30: #{masked_resnet_forward.20} parent=5 // pred_check_branch
      %181 = sbr.rel (%p178) target = $region32
    $region31: #{masked_resnet_forward.20} parent=5 // pred_region
      %s182 = ssub.s32 %s11, 1
      %s183 = smul.u32 32, %s16
      %p184 = scmp.lt.s32.totalorder %s183, 63
      %s185 = scalar_select %p184, %s183, 63
      %s186 = smul.addr %s185, 4
      %s187 = scalar_lea.vmem %s0, %s186
      %p188 = pneg %p37
      %p189 = pneg %p34
      %s190 = smul.u32 32, %s16
      %p191 = scmp.lt.s32.totalorder %s190, 63
      %s192 = scalar_select %p191, %s190, 63
      %s193 = smul.addr %s192, 8
      %s194 = scalar_lea.vmem %s1, %s193
      %p195 = pneg %p63
      %p196 = pneg %p60
      %p197 = pneg %p84
      %p198 = pneg %p81
      %p199 = pneg %p110
      %p200 = pneg %p107
      %s201 = smul.u32 32, %s16
      %p202 = scmp.lt.s32.totalorder %s201, 63
      %s203 = scalar_select %p202, %s201, 63
      %s204 = smul.addr %s203, 8
      %s205 = scalar_lea.vmem %s3, %s204
      %p206 = pneg %p136
      %p207 = pneg %p133
      %p208 = scmp.lt.s32.totalorder %s16, 1
      %s209 = scalar_select %p208, %s16, 1
      %s210 = smul.addr %s209, 2
      %s211 = scalar_lea.vmem %s4, %s210
      %s212 = smul.u32 32, %s16
      %p213 = scmp.lt.s32.totalorder %s212, 63
      %s214 = scalar_select %p213, %s212, 63
      %s215 = smul.addr %s214, 4
      %s216 = scalar_lea.vmem %s0, %s215
      %s217 = smul.u32 32, %s16
      %s218 = smul.u32 32, %s16
      %p219 = scmp.lt.s32.totalorder %s218, 63
      %s220 = scalar_select %p219, %s218, 63
      %s221 = smul.addr %s220, 8
      %s222 = scalar_lea.vmem %s1, %s221
      %s223 = smul.u32 32, %s16
      %s224 = smul.u32 32, %s16
      %p225 = scmp.lt.s32.totalorder %s224, 63
      %s226 = scalar_select %p225, %s224, 63
      %s227 = smul.addr %s226, 8
      %s228 = scalar_lea.vmem %s3, %s227
      %s229 = smul.u32 32, %s16
      %p230 = scmp.lt.s32.totalorder %s16, 1
      %s231 = scalar_select %p230, %s16, 1
      %s232 = smul.addr %s231, 2
      %s233 = scalar_lea.vmem %s4, %s232
      %v235 = vld [vmem:[%s216] sm:$0xf]
      %v236 = vld [vmem:[%s216 + $0x4] sm:$0xf]
      %v237 = vld [vmem:[%s216 + $0x8] sm:$0xf]
      %v238 = vld [vmem:[%s216 + $0xc] sm:$0xf]
      %v239 = vld [vmem:[%s216 + $0x10] sm:$0xf]
      %v240 = vld [vmem:[%s216 + $0x14] sm:$0xf]
      %v241 = vld [vmem:[%s216 + $0x18] sm:$0xf]
      %v242 = vld [vmem:[%s216 + $0x1c] sm:$0xf]
      %v243 = vld [vmem:[%s216 + $0x20] sm:$0xf]
      %v244 = vld [vmem:[%s216 + $0x24] sm:$0xf]
      %v245 = vld [vmem:[%s216 + $0x28] sm:$0xf]
      %v246 = vld [vmem:[%s216 + $0x2c] sm:$0xf]
      %v247 = vld [vmem:[%s216 + $0x30] sm:$0xf]
      %v248 = vld [vmem:[%s216 + $0x34] sm:$0xf]
      %v249 = vld [vmem:[%s216 + $0x38] sm:$0xf]
      %v250 = vld [vmem:[%s216 + $0x3c] sm:$0xf]
      %v251 = vld [vmem:[%s216 + $0x40] sm:$0xf]
      %v252 = vld [vmem:[%s216 + $0x44] sm:$0xf]
      %v253 = vld [vmem:[%s216 + $0x48] sm:$0xf]
      %v254 = vld [vmem:[%s216 + $0x4c] sm:$0xf]
      %v255 = vld [vmem:[%s216 + $0x50] sm:$0xf]
      %v256 = vld [vmem:[%s216 + $0x54] sm:$0xf]
      %v257 = vld [vmem:[%s216 + $0x58] sm:$0xf]
      %v258 = vld [vmem:[%s216 + $0x5c] sm:$0xf]
      %v259 = vld [vmem:[%s216 + $0x60] sm:$0xf]
      %v260 = vld [vmem:[%s216 + $0x64] sm:$0xf]
      %v261 = vld [vmem:[%s216 + $0x68] sm:$0xf]
      %v262 = vld [vmem:[%s216 + $0x6c] sm:$0xf]
      %v263 = vld [vmem:[%s216 + $0x70] sm:$0xf]
      %v264 = vld [vmem:[%s216 + $0x74] sm:$0xf]
      %v265 = vld [vmem:[%s216 + $0x78] sm:$0xf]
      %v266 = vld [vmem:[%s216 + $0x7c] sm:$0xf]
      %v267 = vld [vmem:[%s2] sm:$0xf]
      %v268 = vld [vmem:[%s2 + $0x4] sm:$0xf]
      %v269 = vld [vmem:[%s2 + $0x8] sm:$0xf]
      %v270 = vld [vmem:[%s2 + $0xc] sm:$0xf]
      %v271 = vld [vmem:[%s2 + $0x10] sm:$0xf]
      %v272 = vld [vmem:[%s2 + $0x14] sm:$0xf]
      %v273 = vld [vmem:[%s2 + $0x18] sm:$0xf]
      %v274 = vld [vmem:[%s2 + $0x1c] sm:$0xf]
      %v275 = vld [vmem:[%s2 + $0x20] sm:$0xf]
      %v308 = vunpack.c.l.b16 %v235
      %v309 = vunpack.c.l.b16 %v236
      %v310 = vunpack.c.l.b16 %v237
      %v311 = vunpack.c.l.b16 %v238
      %v312 = vunpack.c.l.b16 %v239
      %v313 = vunpack.c.l.b16 %v240
      %v314 = vunpack.c.l.b16 %v241
      %v315 = vunpack.c.l.b16 %v242
      %v316 = vunpack.c.l.b16 %v243
      %v317 = vunpack.c.l.b16 %v244
      %v318 = vunpack.c.l.b16 %v245
      %v319 = vunpack.c.l.b16 %v246
      %v320 = vunpack.c.l.b16 %v247
      %v321 = vunpack.c.l.b16 %v248
      %v322 = vunpack.c.l.b16 %v249
      %v323 = vunpack.c.l.b16 %v250
      %v324 = vunpack.c.l.b16 %v251
      %v325 = vunpack.c.l.b16 %v252
      %v326 = vunpack.c.l.b16 %v253
      %v327 = vunpack.c.l.b16 %v254
      %v328 = vunpack.c.l.b16 %v255
      %v329 = vunpack.c.l.b16 %v256
      %v330 = vunpack.c.l.b16 %v257
      %v331 = vunpack.c.l.b16 %v258
      %v332 = vunpack.c.l.b16 %v259
      %v333 = vunpack.c.l.b16 %v260
      %v334 = vunpack.c.l.b16 %v261
      %v335 = vunpack.c.l.b16 %v262
      %v336 = vunpack.c.l.b16 %v263
      %v337 = vunpack.c.l.b16 %v264
      %v338 = vunpack.c.l.b16 %v265
      %v339 = vunpack.c.l.b16 %v266
      %v340 = vpack.c.b16 %v309, %v308
      %v341 = vpack.c.b16 %v311, %v310
      %v342 = vpack.c.b16 %v313, %v312
      %v343 = vpack.c.b16 %v315, %v314
      %v344 = vpack.c.b16 %v317, %v316
      %v345 = vpack.c.b16 %v319, %v318
      %v346 = vpack.c.b16 %v321, %v320
      %v347 = vpack.c.b16 %v323, %v322
      %v348 = vpack.c.b16 %v325, %v324
      %v349 = vpack.c.b16 %v327, %v326
      %v350 = vpack.c.b16 %v329, %v328
      %v351 = vpack.c.b16 %v331, %v330
      %v352 = vpack.c.b16 %v333, %v332
      %v353 = vpack.c.b16 %v335, %v334
      %v354 = vpack.c.b16 %v337, %v336
      %v355 = vpack.c.b16 %v339, %v338
      %v365 = vunpack.c.l.b16 %v267
      %v366 = vunpack.c.l.b16 %v268
      %v367 = vunpack.c.l.b16 %v269
      %v368 = vunpack.c.l.b16 %v270
      %v369 = vunpack.c.l.b16 %v271
      %v370 = vunpack.c.l.b16 %v272
      %v371 = vunpack.c.l.b16 %v273
      %v372 = vunpack.c.l.b16 %v274
      %v373 = vunpack.c.l.b16 %v275
      %v374 = vpack.c.b16 %v366, %v365
      %v375 = vpack.c.b16 %v368, %v367
      %v376 = vpack.c.b16 %v370, %v369
      %v377 = vpack.c.b16 %v372, %v371
      %v378 = vpack.c.b16 %v373, %v373
      %vm383 = vcmask 588800
      %v385 = vsel %vm383, %v340, 0
      %v388 = vsel %vm383, %v341, 0
      %v391 = vsel %vm383, %v342, 0
      %v394 = vsel %vm383, %v343, 0
      %v397 = vsel %vm383, %v344, 0
      %v400 = vsel %vm383, %v345, 0
      %v403 = vsel %vm383, %v346, 0
      %v406 = vsel %vm383, %v347, 0
      %v409 = vsel %vm383, %v348, 0
      %v412 = vsel %vm383, %v349, 0
      %v415 = vsel %vm383, %v350, 0
      %v418 = vsel %vm383, %v351, 0
      %v421 = vsel %vm383, %v352, 0
      %v424 = vsel %vm383, %v353, 0
      %v427 = vsel %vm383, %v354, 0
      %v430 = vsel %vm383, %v355, 0
      %vm432 = vcmask 1043456
      %v434 = vsel %vm432, %v378, 0
      %436 = vmatpush.bf16.msra.mxu0 0
      %437 = vmatpush.bf16.msra.mxu0 0
      %438 = vmatpush.bf16.msra.mxu0 0
      %439 = vmatpush.bf16.msra.mxu0 %v434
      %440 = vmatpush.bf16.msra.mxu0 %v377
      %441 = vmatpush.bf16.msra.mxu0 %v376
      %442 = vmatpush.bf16.msra.mxu0 %v375
      %443 = vmatpush.bf16.msra.mxu0 %v374
      %444 = vmatmul.bf16.gmra.mxu0 %v385
      %v445 = vpop.f32.mrf.mxu0
      %v446 = vadd.f32 0.0, %v445
      %v447 = vpop.f32.mrf.mxu0
      %v448 = vadd.f32 0.0, %v447
      %449 = vmatmul.bf16.gmra.mxu0 %v388
      %v450 = vpop.f32.mrf.mxu0
      %v451 = vadd.f32 0.0, %v450
      %v452 = vpop.f32.mrf.mxu0
      %v453 = vadd.f32 0.0, %v452
      %454 = vmatmul.bf16.gmra.mxu0 %v391
      %v455 = vpop.f32.mrf.mxu0
      %v456 = vadd.f32 0.0, %v455
      %v457 = vpop.f32.mrf.mxu0
      %v458 = vadd.f32 0.0, %v457
      %459 = vmatmul.bf16.gmra.mxu0 %v394
      %v460 = vpop.f32.mrf.mxu0
      %v461 = vadd.f32 0.0, %v460
      %v462 = vpop.f32.mrf.mxu0
      %v463 = vadd.f32 0.0, %v462
      %464 = vmatmul.bf16.gmra.mxu0 %v397
      %v465 = vpop.f32.mrf.mxu0
      %v466 = vadd.f32 0.0, %v465
      %v467 = vpop.f32.mrf.mxu0
      %v468 = vadd.f32 0.0, %v467
      %469 = vmatmul.bf16.gmra.mxu0 %v400
      %v470 = vpop.f32.mrf.mxu0
      %v471 = vadd.f32 0.0, %v470
      %v472 = vpop.f32.mrf.mxu0
      %v473 = vadd.f32 0.0, %v472
      %474 = vmatmul.bf16.gmra.mxu0 %v403
      %v475 = vpop.f32.mrf.mxu0
      %v476 = vadd.f32 0.0, %v475
      %v477 = vpop.f32.mrf.mxu0
      %v478 = vadd.f32 0.0, %v477
      %479 = vmatmul.bf16.gmra.mxu0 %v406
      %v480 = vpop.f32.mrf.mxu0
      %v481 = vadd.f32 0.0, %v480
      %v482 = vpop.f32.mrf.mxu0
      %v483 = vadd.f32 0.0, %v482
      %484 = vmatmul.bf16.gmra.mxu0 %v409
      %v485 = vpop.f32.mrf.mxu0
      %v486 = vadd.f32 0.0, %v485
      %v487 = vpop.f32.mrf.mxu0
      %v488 = vadd.f32 0.0, %v487
      %489 = vmatmul.bf16.gmra.mxu0 %v412
      %v490 = vpop.f32.mrf.mxu0
      %v491 = vadd.f32 0.0, %v490
      %v492 = vpop.f32.mrf.mxu0
      %v493 = vadd.f32 0.0, %v492
      %494 = vmatmul.bf16.gmra.mxu0 %v415
      %v495 = vpop.f32.mrf.mxu0
      %v496 = vadd.f32 0.0, %v495
      %v497 = vpop.f32.mrf.mxu0
      %v498 = vadd.f32 0.0, %v497
      %499 = vmatmul.bf16.gmra.mxu0 %v418
      %v500 = vpop.f32.mrf.mxu0
      %v501 = vadd.f32 0.0, %v500
      %v502 = vpop.f32.mrf.mxu0
      %v503 = vadd.f32 0.0, %v502
      %504 = vmatmul.bf16.gmra.mxu0 %v421
      %v505 = vpop.f32.mrf.mxu0
      %v506 = vadd.f32 0.0, %v505
      %v507 = vpop.f32.mrf.mxu0
      %v508 = vadd.f32 0.0, %v507
      %509 = vmatmul.bf16.gmra.mxu0 %v424
      %v510 = vpop.f32.mrf.mxu0
      %v511 = vadd.f32 0.0, %v510
      %v512 = vpop.f32.mrf.mxu0
      %v513 = vadd.f32 0.0, %v512
      %514 = vmatmul.bf16.gmra.mxu0 %v427
      %v515 = vpop.f32.mrf.mxu0
      %v516 = vadd.f32 0.0, %v515
      %v517 = vpop.f32.mrf.mxu0
      %v518 = vadd.f32 0.0, %v517
      %519 = vmatmul.bf16.gmra.mxu0 %v430
      %v520 = vpop.f32.mrf.mxu0
      %v521 = vadd.f32 0.0, %v520
      %v522 = vpop.f32.mrf.mxu0
      %v523 = vadd.f32 0.0, %v522
      %524 = vdwg.mxu0
      %v525 = vld [vmem:[%s222] sm:$0xff]
      %v526 = vld [vmem:[%s222 + $0x8] sm:$0xff]
      %v527 = vld [vmem:[%s222 + $0x10] sm:$0xff]
      %v528 = vld [vmem:[%s222 + $0x18] sm:$0xff]
      %v529 = vld [vmem:[%s222 + $0x20] sm:$0xff]
      %v530 = vld [vmem:[%s222 + $0x28] sm:$0xff]
      %v531 = vld [vmem:[%s222 + $0x30] sm:$0xff]
      %v532 = vld [vmem:[%s222 + $0x38] sm:$0xff]
      %v533 = vld [vmem:[%s222 + $0x40] sm:$0xff]
      %v534 = vld [vmem:[%s222 + $0x48] sm:$0xff]
      %v535 = vld [vmem:[%s222 + $0x50] sm:$0xff]
      %v536 = vld [vmem:[%s222 + $0x58] sm:$0xff]
      %v537 = vld [vmem:[%s222 + $0x60] sm:$0xff]
      %v538 = vld [vmem:[%s222 + $0x68] sm:$0xff]
      %v539 = vld [vmem:[%s222 + $0x70] sm:$0xff]
      %v540 = vld [vmem:[%s222 + $0x78] sm:$0xff]
      %v541 = vld [vmem:[%s222 + $0x80] sm:$0xff]
      %v542 = vld [vmem:[%s222 + $0x88] sm:$0xff]
      %v543 = vld [vmem:[%s222 + $0x90] sm:$0xff]
      %v544 = vld [vmem:[%s222 + $0x98] sm:$0xff]
      %v545 = vld [vmem:[%s222 + $0xa0] sm:$0xff]
      %v546 = vld [vmem:[%s222 + $0xa8] sm:$0xff]
      %v547 = vld [vmem:[%s222 + $0xb0] sm:$0xff]
      %v548 = vld [vmem:[%s222 + $0xb8] sm:$0xff]
      %v549 = vld [vmem:[%s222 + $0xc0] sm:$0xff]
      %v550 = vld [vmem:[%s222 + $0xc8] sm:$0xff]
      %v551 = vld [vmem:[%s222 + $0xd0] sm:$0xff]
      %v552 = vld [vmem:[%s222 + $0xd8] sm:$0xff]
      %v553 = vld [vmem:[%s222 + $0xe0] sm:$0xff]
      %v554 = vld [vmem:[%s222 + $0xe8] sm:$0xff]
      %v555 = vld [vmem:[%s222 + $0xf0] sm:$0xff]
      %v556 = vld [vmem:[%s222 + $0xf8] sm:$0xff]
      %558 = vset.pattern.permute.xlu0 0
      %559 = vperm.xlu0 %558, %v525
      %v560 = vpop.permute.xlu0 %559
      %563 = vset.pattern.permute.xlu0 0
      %564 = vperm.xlu0 %563, %v526
      %v565 = vpop.permute.xlu0 %564
      %568 = vset.pattern.permute.xlu0 0
      %569 = vperm.xlu0 %568, %v527
      %v570 = vpop.permute.xlu0 %569
      %573 = vset.pattern.permute.xlu0 0
      %574 = vperm.xlu0 %573, %v528
      %v575 = vpop.permute.xlu0 %574
      %578 = vset.pattern.permute.xlu0 0
      %579 = vperm.xlu0 %578, %v529
      %v580 = vpop.permute.xlu0 %579
      %583 = vset.pattern.permute.xlu0 0
      %584 = vperm.xlu0 %583, %v530
      %v585 = vpop.permute.xlu0 %584
      %588 = vset.pattern.permute.xlu0 0
      %589 = vperm.xlu0 %588, %v531
      %v590 = vpop.permute.xlu0 %589
      %593 = vset.pattern.permute.xlu0 0
      %594 = vperm.xlu0 %593, %v532
      %v595 = vpop.permute.xlu0 %594
      %598 = vset.pattern.permute.xlu0 0
      %599 = vperm.xlu0 %598, %v533
      %v600 = vpop.permute.xlu0 %599
      %603 = vset.pattern.permute.xlu0 0
      %604 = vperm.xlu0 %603, %v534
      %v605 = vpop.permute.xlu0 %604
      %608 = vset.pattern.permute.xlu0 0
      %609 = vperm.xlu0 %608, %v535
      %v610 = vpop.permute.xlu0 %609
      %613 = vset.pattern.permute.xlu0 0
      %614 = vperm.xlu0 %613, %v536
      %v615 = vpop.permute.xlu0 %614
      %618 = vset.pattern.permute.xlu0 0
      %619 = vperm.xlu0 %618, %v537
      %v620 = vpop.permute.xlu0 %619
      %623 = vset.pattern.permute.xlu0 0
      %624 = vperm.xlu0 %623, %v538
      %v625 = vpop.permute.xlu0 %624
      %628 = vset.pattern.permute.xlu0 0
      %629 = vperm.xlu0 %628, %v539
      %v630 = vpop.permute.xlu0 %629
      %633 = vset.pattern.permute.xlu0 0
      %634 = vperm.xlu0 %633, %v540
      %v635 = vpop.permute.xlu0 %634
      %638 = vset.pattern.permute.xlu0 0
      %639 = vperm.xlu0 %638, %v541
      %v640 = vpop.permute.xlu0 %639
      %643 = vset.pattern.permute.xlu0 0
      %644 = vperm.xlu0 %643, %v542
      %v645 = vpop.permute.xlu0 %644
      %648 = vset.pattern.permute.xlu0 0
      %649 = vperm.xlu0 %648, %v543
      %v650 = vpop.permute.xlu0 %649
      %653 = vset.pattern.permute.xlu0 0
      %654 = vperm.xlu0 %653, %v544
      %v655 = vpop.permute.xlu0 %654
      %658 = vset.pattern.permute.xlu0 0
      %659 = vperm.xlu0 %658, %v545
      %v660 = vpop.permute.xlu0 %659
      %663 = vset.pattern.permute.xlu0 0
      %664 = vperm.xlu0 %663, %v546
      %v665 = vpop.permute.xlu0 %664
      %668 = vset.pattern.permute.xlu0 0
      %669 = vperm.xlu0 %668, %v547
      %v670 = vpop.permute.xlu0 %669
      %673 = vset.pattern.permute.xlu0 0
      %674 = vperm.xlu0 %673, %v548
      %v675 = vpop.permute.xlu0 %674
      %678 = vset.pattern.permute.xlu0 0
      %679 = vperm.xlu0 %678, %v549
      %v680 = vpop.permute.xlu0 %679
      %683 = vset.pattern.permute.xlu0 0
      %684 = vperm.xlu0 %683, %v550
      %v685 = vpop.permute.xlu0 %684
      %688 = vset.pattern.permute.xlu0 0
      %689 = vperm.xlu0 %688, %v551
      %v690 = vpop.permute.xlu0 %689
      %693 = vset.pattern.permute.xlu0 0
      %694 = vperm.xlu0 %693, %v552
      %v695 = vpop.permute.xlu0 %694
      %698 = vset.pattern.permute.xlu0 0
      %699 = vperm.xlu0 %698, %v553
      %v700 = vpop.permute.xlu0 %699
      %703 = vset.pattern.permute.xlu0 0
      %704 = vperm.xlu0 %703, %v554
      %v705 = vpop.permute.xlu0 %704
      %708 = vset.pattern.permute.xlu0 0
      %709 = vperm.xlu0 %708, %v555
      %v710 = vpop.permute.xlu0 %709
      %713 = vset.pattern.permute.xlu0 0
      %714 = vperm.xlu0 %713, %v556
      %v715 = vpop.permute.xlu0 %714
      %v717 = vmul.f32 %v446, %v560
      %v718 = vmul.f32 %v448, %v565
      %v719 = vmul.f32 %v451, %v570
      %v720 = vmul.f32 %v453, %v575
      %v721 = vmul.f32 %v456, %v580
      %v722 = vmul.f32 %v458, %v585
      %v723 = vmul.f32 %v461, %v590
      %v724 = vmul.f32 %v463, %v595
      %v725 = vmul.f32 %v466, %v600
      %v726 = vmul.f32 %v468, %v605
      %v727 = vmul.f32 %v471, %v610
      %v728 = vmul.f32 %v473, %v615
      %v729 = vmul.f32 %v476, %v620
      %v730 = vmul.f32 %v478, %v625
      %v731 = vmul.f32 %v481, %v630
      %v732 = vmul.f32 %v483, %v635
      %v733 = vmul.f32 %v486, %v640
      %v734 = vmul.f32 %v488, %v645
      %v735 = vmul.f32 %v491, %v650
      %v736 = vmul.f32 %v493, %v655
      %v737 = vmul.f32 %v496, %v660
      %v738 = vmul.f32 %v498, %v665
      %v739 = vmul.f32 %v501, %v670
      %v740 = vmul.f32 %v503, %v675
      %v741 = vmul.f32 %v506, %v680
      %v742 = vmul.f32 %v508, %v685
      %v743 = vmul.f32 %v511, %v690
      %v744 = vmul.f32 %v513, %v695
      %v745 = vmul.f32 %v516, %v700
      %v746 = vmul.f32 %v518, %v705
      %v747 = vmul.f32 %v521, %v710
      %v748 = vmul.f32 %v523, %v715
      %749 = vst [vmem:[%s228] sm:$0xff] %v717
      %750 = vst [vmem:[%s228 + $0x8] sm:$0xff] %v718
      %751 = vst [vmem:[%s228 + $0x10] sm:$0xff] %v719
      %752 = vst [vmem:[%s228 + $0x18] sm:$0xff] %v720
      %753 = vst [vmem:[%s228 + $0x20] sm:$0xff] %v721
      %754 = vst [vmem:[%s228 + $0x28] sm:$0xff] %v722
      %755 = vst [vmem:[%s228 + $0x30] sm:$0xff] %v723
      %756 = vst [vmem:[%s228 + $0x38] sm:$0xff] %v724
      %757 = vst [vmem:[%s228 + $0x40] sm:$0xff] %v725
      %758 = vst [vmem:[%s228 + $0x48] sm:$0xff] %v726
      %759 = vst [vmem:[%s228 + $0x50] sm:$0xff] %v727
      %760 = vst [vmem:[%s228 + $0x58] sm:$0xff] %v728
      %761 = vst [vmem:[%s228 + $0x60] sm:$0xff] %v729
      %762 = vst [vmem:[%s228 + $0x68] sm:$0xff] %v730
      %763 = vst [vmem:[%s228 + $0x70] sm:$0xff] %v731
      %764 = vst [vmem:[%s228 + $0x78] sm:$0xff] %v732
      %765 = vst [vmem:[%s228 + $0x80] sm:$0xff] %v733
      %766 = vst [vmem:[%s228 + $0x88] sm:$0xff] %v734
      %767 = vst [vmem:[%s228 + $0x90] sm:$0xff] %v735
      %768 = vst [vmem:[%s228 + $0x98] sm:$0xff] %v736
      %769 = vst [vmem:[%s228 + $0xa0] sm:$0xff] %v737
      %770 = vst [vmem:[%s228 + $0xa8] sm:$0xff] %v738
      %771 = vst [vmem:[%s228 + $0xb0] sm:$0xff] %v739
      %772 = vst [vmem:[%s228 + $0xb8] sm:$0xff] %v740
      %773 = vst [vmem:[%s228 + $0xc0] sm:$0xff] %v741
      %774 = vst [vmem:[%s228 + $0xc8] sm:$0xff] %v742
      %775 = vst [vmem:[%s228 + $0xd0] sm:$0xff] %v743
      %776 = vst [vmem:[%s228 + $0xd8] sm:$0xff] %v744
      %777 = vst [vmem:[%s228 + $0xe0] sm:$0xff] %v745
      %778 = vst [vmem:[%s228 + $0xe8] sm:$0xff] %v746
      %779 = vst [vmem:[%s228 + $0xf0] sm:$0xff] %v747
      %780 = vst [vmem:[%s228 + $0xf8] sm:$0xff] %v748
      %v781 = vadd.f32 %v717, %v718
      %v782 = vadd.f32 %v781, %v719
      %v783 = vadd.f32 %v782, %v720
      %v784 = vadd.f32 %v783, %v721
      %v785 = vadd.f32 %v784, %v722
      %v786 = vadd.f32 %v785, %v723
      %v787 = vadd.f32 %v786, %v724
      %v788 = vadd.f32 %v787, %v725
      %v789 = vadd.f32 %v788, %v726
      %v790 = vadd.f32 %v789, %v727
      %v791 = vadd.f32 %v790, %v728
      %v792 = vadd.f32 %v791, %v729
      %v793 = vadd.f32 %v792, %v730
      %v794 = vadd.f32 %v793, %v731
      %v795 = vadd.f32 %v794, %v732
      %v796 = vadd.f32 %v795, %v733
      %v797 = vadd.f32 %v796, %v734
      %v798 = vadd.f32 %v797, %v735
      %v799 = vadd.f32 %v798, %v736
      %v800 = vadd.f32 %v799, %v737
      %v801 = vadd.f32 %v800, %v738
      %v802 = vadd.f32 %v801, %v739
      %v803 = vadd.f32 %v802, %v740
      %v804 = vadd.f32 %v803, %v741
      %v805 = vadd.f32 %v804, %v742
      %v806 = vadd.f32 %v805, %v743
      %v807 = vadd.f32 %v806, %v744
      %v808 = vadd.f32 %v807, %v745
      %v809 = vadd.f32 %v808, %v746
      %v810 = vadd.f32 %v809, %v747
      %v811 = vadd.f32 %v810, %v748
      %v812 = vrot.slane %v811, 4
      %v813 = vadd.f32 %v811, %v812
      %v814 = vrot.slane %v813, 2
      %v815 = vadd.f32 %v813, %v814
      %v816 = vrot.slane %v815, 1
      %v817 = vadd.f32 %v815, %v816
      %v818 = vmul.f32 %v817, 0.00390625
      %v819 = vsub.f32 %v717, %v818
      %v820 = vsub.f32 %v718, %v818
      %v821 = vsub.f32 %v719, %v818
      %v822 = vsub.f32 %v720, %v818
      %v823 = vsub.f32 %v721, %v818
      %v824 = vsub.f32 %v722, %v818
      %v825 = vsub.f32 %v723, %v818
      %v826 = vsub.f32 %v724, %v818
      %v827 = vsub.f32 %v725, %v818
      %v828 = vsub.f32 %v726, %v818
      %v829 = vsub.f32 %v727, %v818
      %v830 = vsub.f32 %v728, %v818
      %v831 = vsub.f32 %v729, %v818
      %v832 = vsub.f32 %v730, %v818
      %v833 = vsub.f32 %v731, %v818
      %v834 = vsub.f32 %v732, %v818
      %v835 = vsub.f32 %v733, %v818
      %v836 = vsub.f32 %v734, %v818
      %v837 = vsub.f32 %v735, %v818
      %v838 = vsub.f32 %v736, %v818
      %v839 = vsub.f32 %v737, %v818
      %v840 = vsub.f32 %v738, %v818
      %v841 = vsub.f32 %v739, %v818
      %v842 = vsub.f32 %v740, %v818
      %v843 = vsub.f32 %v741, %v818
      %v844 = vsub.f32 %v742, %v818
      %v845 = vsub.f32 %v743, %v818
      %v846 = vsub.f32 %v744, %v818
      %v847 = vsub.f32 %v745, %v818
      %v848 = vsub.f32 %v746, %v818
      %v849 = vsub.f32 %v747, %v818
      %v850 = vsub.f32 %v748, %v818
      %v851 = vmul.f32 %v819, %v819
      %v852 = vmul.f32 %v820, %v820
      %v853 = vmul.f32 %v821, %v821
      %v854 = vmul.f32 %v822, %v822
      %v855 = vmul.f32 %v823, %v823
      %v856 = vmul.f32 %v824, %v824
      %v857 = vmul.f32 %v825, %v825
      %v858 = vmul.f32 %v826, %v826
      %v859 = vmul.f32 %v827, %v827
      %v860 = vmul.f32 %v828, %v828
      %v861 = vmul.f32 %v829, %v829
      %v862 = vmul.f32 %v830, %v830
      %v863 = vmul.f32 %v831, %v831
      %v864 = vmul.f32 %v832, %v832
      %v865 = vmul.f32 %v833, %v833
      %v866 = vmul.f32 %v834, %v834
      %v867 = vmul.f32 %v835, %v835
      %v868 = vmul.f32 %v836, %v836
      %v869 = vmul.f32 %v837, %v837
      %v870 = vmul.f32 %v838, %v838
      %v871 = vmul.f32 %v839, %v839
      %v872 = vmul.f32 %v840, %v840
      %v873 = vmul.f32 %v841, %v841
      %v874 = vmul.f32 %v842, %v842
      %v875 = vmul.f32 %v843, %v843
      %v876 = vmul.f32 %v844, %v844
      %v877 = vmul.f32 %v845, %v845
      %v878 = vmul.f32 %v846, %v846
      %v879 = vmul.f32 %v847, %v847
      %v880 = vmul.f32 %v848, %v848
      %v881 = vmul.f32 %v849, %v849
      %v882 = vmul.f32 %v850, %v850
      %v883 = vadd.f32 %v851, %v852
      %v884 = vadd.f32 %v883, %v853
      %v885 = vadd.f32 %v884, %v854
      %v886 = vadd.f32 %v885, %v855
      %v887 = vadd.f32 %v886, %v856
      %v888 = vadd.f32 %v887, %v857
      %v889 = vadd.f32 %v888, %v858
      %v890 = vadd.f32 %v889, %v859
      %v891 = vadd.f32 %v890, %v860
      %v892 = vadd.f32 %v891, %v861
      %v893 = vadd.f32 %v892, %v862
      %v894 = vadd.f32 %v893, %v863
      %v895 = vadd.f32 %v894, %v864
      %v896 = vadd.f32 %v895, %v865
      %v897 = vadd.f32 %v896, %v866
      %v898 = vadd.f32 %v897, %v867
      %v899 = vadd.f32 %v898, %v868
      %v900 = vadd.f32 %v899, %v869
      %v901 = vadd.f32 %v900, %v870
      %v902 = vadd.f32 %v901, %v871
      %v903 = vadd.f32 %v902, %v872
      %v904 = vadd.f32 %v903, %v873
      %v905 = vadd.f32 %v904, %v874
      %v906 = vadd.f32 %v905, %v875
      %v907 = vadd.f32 %v906, %v876
      %v908 = vadd.f32 %v907, %v877
      %v909 = vadd.f32 %v908, %v878
      %v910 = vadd.f32 %v909, %v879
      %v911 = vadd.f32 %v910, %v880
      %v912 = vadd.f32 %v911, %v881
      %v913 = vadd.f32 %v912, %v882
      %v914 = vrot.slane %v913, 4
      %v915 = vadd.f32 %v913, %v914
      %v916 = vrot.slane %v915, 2
      %v917 = vadd.f32 %v915, %v916
      %v918 = vrot.slane %v917, 1
      %v919 = vadd.f32 %v917, %v918
      %vm920 = vcmask 1040384
      %v921 = vsel %vm920, %v817, %v919
      %922 = vst [vmem:[%s233] sm:$0x3] %v921
      %s923 = smul.u32 32, %s16
      %p924 = scmp.lt.s32.totalorder %s923, 63
      %s925 = scalar_select %p924, %s923, 63
      %s926 = smul.addr %s925, 8
      %s927 = scalar_lea.vmem %s3, %s926
      %p928 = scmp.lt.s32.totalorder %s16, 1
      %s929 = scalar_select %p928, %s16, 1
      %s930 = smul.addr %s929, 2
      %s931 = scalar_lea.vmem %s4, %s930
      // Predicated region
      $region33: #{masked_resnet_forward.20} parent=31 // pred_check
        %p932 = pneg %p107
      $region34: #{masked_resnet_forward.20} parent=31 // pred_check_branch
        %934 = sbr.rel (%p932) target = $region36
      $region35: #{masked_resnet_forward.20} parent=31 // pred_region
        %s935 = smul.u32 32, %s16
      $region36: #{masked_resnet_forward.20} parent=31 // pred_fallthru
        _
      // Predicated region
      $region37: #{masked_resnet_forward.20} parent=31 // pred_check
        %p936 = pneg %p133
      $region38: #{masked_resnet_forward.20} parent=31 // pred_check_branch
        %938 = sbr.rel (%p936) target = $region40
      $region39: #{masked_resnet_forward.20} parent=31 // pred_region
        _
      $region40: #{masked_resnet_forward.20} parent=31 // pred_fallthru
        _
    $region32: #{masked_resnet_forward.20} parent=5 // pred_fallthru
      _
    %p939 = scmp.le.s32.totalorder 2, %s11
    // Predicated region
    $region41: #{masked_resnet_forward.20} parent=5 // pred_check
      %p940 = pneg %p939
    $region42: #{masked_resnet_forward.20} parent=5 // pred_check_branch
      %942 = sbr.rel (%p940) target = $region44
    $region43: #{masked_resnet_forward.20} parent=5 // pred_region
      %s943 = ssub.s32 %s11, 2
      // Predicated region
      $region45: #{masked_resnet_forward.20} parent=43 // pred_check
        %p944 = pneg %p113
      $region46: #{masked_resnet_forward.20} parent=43 // pred_check_branch
        %946 = sbr.rel (%p944) target = $region48
      $region47: #{masked_resnet_forward.20} parent=43 // pred_region
        %s947 = smul.u32 32, %s17
        %p948 = scmp.lt.s32.totalorder %s947, 63
        %s949 = scalar_select %p948, %s947, 63
        %s950 = smul.addr %s949, 8
        %s951 = scalar_lea.vmem %s3, %s950
      $region48: #{masked_resnet_forward.20} parent=43 // pred_fallthru
        _
      // Predicated region
      $region49: #{masked_resnet_forward.20} parent=43 // pred_check
        %p952 = pneg %p139
      $region50: #{masked_resnet_forward.20} parent=43 // pred_check_branch
        %954 = sbr.rel (%p952) target = $region52
      $region51: #{masked_resnet_forward.20} parent=43 // pred_region
        %p955 = scmp.lt.s32.totalorder %s17, 1
        %s956 = scalar_select %p955, %s17, 1
        %s957 = smul.addr %s956, 2
        %s958 = scalar_lea.vmem %s4, %s957
      $region52: #{masked_resnet_forward.20} parent=43 // pred_fallthru
        _
    $region44: #{masked_resnet_forward.20} parent=5 // pred_fallthru
      _
  $region6: #{masked_resnet_forward.20} parent=0 // loop_footer
    %s15 = sadd.s32 1, %s11
  $region7: #{masked_resnet_forward.20} parent=0 // loop_footer_branch
    %10 = sbr.rel target = $region3
  $region8: #{masked_resnet_forward.20} parent=0 // loop_exit
    _

// kernel: masked_resnet_forward.23
$region0: #{masked_resnet_forward.23}
  #allocation0 [shape = 'u32[]', space=smem, size = 0x4, offset = 0x4, fixed_abs, tag = 'smem constant byte address 0x4 - core index']
  #allocation1 [shape = 'u32[72,128]{1,0:T(1,128)}', space=vmem, size = 0x9000, scoped, tag = 'internal scratch']
  %s0 = inlined_call_operand.vmem [shape: f32[512,128], index: 0, kind: input, shape index: {}]
  %s1 = inlined_call_operand.vmem [shape: f32[512,128], index: 1, kind: input, shape index: {}]
  %s2 = inlined_call_operand.vmem [shape: f32[1,128], index: 2, kind: input, shape index: {}]
  %s3 = inlined_call_operand.vmem [shape: f32[1,128], index: 3, kind: input, shape index: {}]
  %s4 = inlined_call_operand.vmem [shape: f32[512,128], index: 4, kind: output, shape index: {}]
  %s5 = sld [smem:[#allocation0]]
  $region49: #{masked_resnet_forward.23} parent=0
    _
  %s7 = ssub.s32 1, %s5
  %s8 = scalar_select 0, %s7, %s5
  loop: start=0, step=1, limit=4
  $region2: #{masked_resnet_forward.23} parent=0 // loop_pre_header
    _
  $region3: #{masked_resnet_forward.23} parent=0 // loop_header
    %s10 = sphi 0, %s14
    %p11 = scmp.ge.s32.totalorder %s10, 4
    %s20 = sphi 0, %s22
    %s23 = sphi 0, %s20
    %s24 = sphi 0, %s23
    %s40 = sphi 0, %s24
    %s46 = sphi 0, %s48
    %s49 = sphi 0, %s46
    %s50 = sphi 0, %s49
    %s66 = sphi 0, %s50
    %s70 = sphi 0, %s70
    %s72 = sphi 0, %s70
    %s73 = sphi 0, %s72
    %s87 = sphi 0, %s73
    %s91 = sphi 0, %s91
    %s93 = sphi 0, %s91
    %s94 = sphi 0, %s93
    %s108 = sphi 0, %s94
    %s114 = sphi 0, %s116
    %s117 = sphi 0, %s114
    %s118 = sphi 0, %s117
    %s134 = sphi 0, %s118
  $region4: #{masked_resnet_forward.23} parent=0 // loop_header_branch
    %13 = sbr.rel (%p11) target = $region8
  $region5: #{masked_resnet_forward.23} parent=0 // loop_body
    %s15 = ssub.s32 %s10, 1
    %s16 = ssub.s32 %s10, 2
    %s17 = sadd.s32 %s10, 1
    %s18 = ssub.s32 %s10, %s17
    %p19 = scmp.eq.s32.totalorder %s18, 0
    %s21 = sadd.s32 %s20, 1
    %s22 = scalar_select %p19, %s20, %s21
    %p25 = pneg %p19
    %p26 = scmp.eq.s32.totalorder %s10, 1
    %p27 = por %p25, %p26
    %p28 = scmp.ne.s32.totalorder %s20, %s23
    %p29 = scmp.eq.s32.totalorder %s10, 0
    %p30 = por %p28, %p29
    %p31 = scmp.ne.s32.totalorder %s20, %s23
    %p32 = scmp.eq.s32.totalorder %s15, 1
    %p33 = por %p31, %p32
    %p34 = scmp.ne.s32.totalorder %s23, %s24
    %p35 = scmp.eq.s32.totalorder %s15, 0
    %p36 = por %p34, %p35
    %p37 = scmp.ne.s32.totalorder %s23, %s24
    %p38 = scmp.eq.s32.totalorder %s16, 1
    %p39 = por %p37, %p38
    %p41 = scmp.ne.s32.totalorder %s24, %s40
    %p42 = scmp.eq.s32.totalorder %s16, 0
    %p43 = por %p41, %p42
    %s44 = ssub.s32 %s10, %s17
    %p45 = scmp.eq.s32.totalorder %s44, 0
    %s47 = sadd.s32 %s46, 1
    %s48 = scalar_select %p45, %s46, %s47
    %p51 = pneg %p45
    %p52 = scmp.eq.s32.totalorder %s10, 1
    %p53 = por %p51, %p52
    %p54 = scmp.ne.s32.totalorder %s46, %s49
    %p55 = scmp.eq.s32.totalorder %s10, 0
    %p56 = por %p54, %p55
    %p57 = scmp.ne.s32.totalorder %s46, %s49
    %p58 = scmp.eq.s32.totalorder %s15, 1
    %p59 = por %p57, %p58
    %p60 = scmp.ne.s32.totalorder %s49, %s50
    %p61 = scmp.eq.s32.totalorder %s15, 0
    %p62 = por %p60, %p61
    %p63 = scmp.ne.s32.totalorder %s49, %s50
    %p64 = scmp.eq.s32.totalorder %s16, 1
    %p65 = por %p63, %p64
    %p67 = scmp.ne.s32.totalorder %s50, %s66
    %p68 = scmp.eq.s32.totalorder %s16, 0
    %p69 = por %p67, %p68
    %s71 = sadd.s32 %s70, 1
    %p74 = scmp.eq.s32.totalorder %s10, 1
    %p75 = scmp.ne.s32.totalorder %s70, %s72
    %p76 = scmp.eq.s32.totalorder %s10, 0
    %p77 = por %p75, %p76
    %p78 = scmp.ne.s32.totalorder %s70, %s72
    %p79 = scmp.eq.s32.totalorder %s15, 1
    %p80 = por %p78, %p79
    %p81 = scmp.ne.s32.totalorder %s72, %s73
    %p82 = scmp.eq.s32.totalorder %s15, 0
    %p83 = por %p81, %p82
    %p84 = scmp.ne.s32.totalorder %s72, %s73
    %p85 = scmp.eq.s32.totalorder %s16, 1
    %p86 = por %p84, %p85
    %p88 = scmp.ne.s32.totalorder %s73, %s87
    %p89 = scmp.eq.s32.totalorder %s16, 0
    %p90 = por %p88, %p89
    %s92 = sadd.s32 %s91, 1
    %p95 = scmp.eq.s32.totalorder %s10, 1
    %p96 = scmp.ne.s32.totalorder %s91, %s93
    %p97 = scmp.eq.s32.totalorder %s10, 0
    %p98 = por %p96, %p97
    %p99 = scmp.ne.s32.totalorder %s91, %s93
    %p100 = scmp.eq.s32.totalorder %s15, 1
    %p101 = por %p99, %p100
    %p102 = scmp.ne.s32.totalorder %s93, %s94
    %p103 = scmp.eq.s32.totalorder %s15, 0
    %p104 = por %p102, %p103
    %p105 = scmp.ne.s32.totalorder %s93, %s94
    %p106 = scmp.eq.s32.totalorder %s16, 1
    %p107 = por %p105, %p106
    %p109 = scmp.ne.s32.totalorder %s94, %s108
    %p110 = scmp.eq.s32.totalorder %s16, 0
    %p111 = por %p109, %p110
    %s112 = ssub.s32 %s10, %s17
    %p113 = scmp.eq.s32.totalorder %s112, 0
    %s115 = sadd.s32 %s114, 1
    %s116 = scalar_select %p113, %s114, %s115
    %p119 = pneg %p113
    %p120 = scmp.eq.s32.totalorder %s10, 1
    %p121 = por %p119, %p120
    %p122 = scmp.ne.s32.totalorder %s114, %s117
    %p123 = scmp.eq.s32.totalorder %s10, 0
    %p124 = por %p122, %p123
    %p125 = scmp.ne.s32.totalorder %s114, %s117
    %p126 = scmp.eq.s32.totalorder %s15, 1
    %p127 = por %p125, %p126
    %p128 = scmp.ne.s32.totalorder %s117, %s118
    %p129 = scmp.eq.s32.totalorder %s15, 0
    %p130 = por %p128, %p129
    %p131 = scmp.ne.s32.totalorder %s117, %s118
    %p132 = scmp.eq.s32.totalorder %s16, 1
    %p133 = por %p131, %p132
    %p135 = scmp.ne.s32.totalorder %s118, %s134
    %p136 = scmp.eq.s32.totalorder %s16, 0
    %p137 = por %p135, %p136
    %p138 = scmp.le.s32.totalorder 1, %s10
    %p139 = scmp.lt.s32.totalorder %s10, 3
    %p140 = pnand %p138, %p139
    %p141 = pneg %p140
    // Predicated region
    $region9: #{masked_resnet_forward.23} parent=5 // pred_check
      _
    $region10: #{masked_resnet_forward.23} parent=5 // pred_check_branch
      %143 = sbr.rel (%p140) target = $region12
    $region11: #{masked_resnet_forward.23} parent=5 // pred_region
      %s144 = ssub.s32 %s10, 1
      // Predicated region
      $region13: #{masked_resnet_forward.23} parent=11 // pred_check
        %p145 = pneg %p83
      $region14: #{masked_resnet_forward.23} parent=11 // pred_check_branch
        %147 = sbr.rel (%p145) target = $region16
      $region15: #{masked_resnet_forward.23} parent=11 // pred_region
        _
      $region16: #{masked_resnet_forward.23} parent=11 // pred_fallthru
        _
      // Predicated region
      $region17: #{masked_resnet_forward.23} parent=11 // pred_check
        %p148 = pneg %p104
      $region18: #{masked_resnet_forward.23} parent=11 // pred_check_branch
        %150 = sbr.rel (%p148) target = $region20
      $region19: #{masked_resnet_forward.23} parent=11 // pred_region
        _
      $region20: #{masked_resnet_forward.23} parent=11 // pred_fallthru
        _
    $region12: #{masked_resnet_forward.23} parent=5 // pred_fallthru
      _
    %p151 = scmp.lt.s32.totalorder %s10, 2
    // Predicated region
    $region21: #{masked_resnet_forward.23} parent=5 // pred_check
      %p152 = pneg %p151
    $region22: #{masked_resnet_forward.23} parent=5 // pred_check_branch
      %154 = sbr.rel (%p152) target = $region24
    $region23: #{masked_resnet_forward.23} parent=5 // pred_region
      // Predicated region
      $region25: #{masked_resnet_forward.23} parent=23 // pred_check
        %p155 = pneg %p30
      $region26: #{masked_resnet_forward.23} parent=23 // pred_check_branch
        %157 = sbr.rel (%p155) target = $region28
      $region27: #{masked_resnet_forward.23} parent=23 // pred_region
        %s158 = smul.u32 32, %s10
        %p159 = scmp.lt.s32.totalorder %s158, 63
        %s160 = scalar_select %p159, %s158, 63
        %s161 = smul.addr %s160, 8
        %s162 = scalar_lea.vmem %s0, %s161
        %s163 = smul.u32 32, %s10
      $region28: #{masked_resnet_forward.23} parent=23 // pred_fallthru
        _
      // Predicated region
      $region29: #{masked_resnet_forward.23} parent=23 // pred_check
        %p164 = pneg %p56
      $region30: #{masked_resnet_forward.23} parent=23 // pred_check_branch
        %166 = sbr.rel (%p164) target = $region32
      $region31: #{masked_resnet_forward.23} parent=23 // pred_region
        %s167 = smul.u32 32, %s10
        %p168 = scmp.lt.s32.totalorder %s167, 63
        %s169 = scalar_select %p168, %s167, 63
        %s170 = smul.addr %s169, 8
        %s171 = scalar_lea.vmem %s1, %s170
        %s172 = smul.u32 32, %s10
      $region32: #{masked_resnet_forward.23} parent=23 // pred_fallthru
        _
    $region24: #{masked_resnet_forward.23} parent=5 // pred_fallthru
      _
    %p173 = scmp.le.s32.totalorder 1, %s10
    %p174 = scmp.lt.s32.totalorder %s10, 3
    %p175 = pnand %p173, %p174
    %p176 = pneg %p175
    // Predicated region
    $region33: #{masked_resnet_forward.23} parent=5 // pred_check
      _
    $region34: #{masked_resnet_forward.23} parent=5 // pred_check_branch
      %178 = sbr.rel (%p175) target = $region36
    $region35: #{masked_resnet_forward.23} parent=5 // pred_region
      %s179 = ssub.s32 %s10, 1
      %s180 = smul.u32 32, %s15
      %p181 = scmp.lt.s32.totalorder %s180, 63
      %s182 = scalar_select %p181, %s180, 63
      %s183 = smul.addr %s182, 8
      %s184 = scalar_lea.vmem %s0, %s183
      %p185 = pneg %p36
      %p186 = pneg %p33
      %s187 = smul.u32 32, %s15
      %p188 = scmp.lt.s32.totalorder %s187, 63
      %s189 = scalar_select %p188, %s187, 63
      %s190 = smul.addr %s189, 8
      %s191 = scalar_lea.vmem %s1, %s190
      %p192 = pneg %p62
      %p193 = pneg %p59
      %p194 = pneg %p83
      %p195 = pneg %p80
      %p196 = pneg %p104
      %p197 = pneg %p101
      %p198 = pneg %p130
      %p199 = pneg %p127
      %s200 = smul.u32 32, %s15
      %p201 = scmp.lt.s32.totalorder %s200, 63
      %s202 = scalar_select %p201, %s200, 63
      %s203 = smul.addr %s202, 8
      %s204 = scalar_lea.vmem %s4, %s203
      %s205 = smul.u32 32, %s15
      %p206 = scmp.lt.s32.totalorder %s205, 63
      %s207 = scalar_select %p206, %s205, 63
      %s208 = smul.addr %s207, 8
      %s209 = scalar_lea.vmem %s0, %s208
      %s210 = smul.u32 32, %s15
      %s211 = smul.u32 32, %s15
      %p212 = scmp.lt.s32.totalorder %s211, 63
      %s213 = scalar_select %p212, %s211, 63
      %s214 = smul.addr %s213, 8
      %s215 = scalar_lea.vmem %s1, %s214
      %s216 = smul.u32 32, %s15
      %s217 = smul.u32 32, %s15
      %p218 = scmp.lt.s32.totalorder %s217, 63
      %s219 = scalar_select %p218, %s217, 63
      %s220 = smul.addr %s219, 8
      %s221 = scalar_lea.vmem %s4, %s220
      %s222 = smul.u32 32, %s15
      %v223 = vld [vmem:[%s209] sm:$0xff]
      %v224 = vld [vmem:[%s209 + $0x8] sm:$0xff]
      %v225 = vld [vmem:[%s209 + $0x10] sm:$0xff]
      %v226 = vld [vmem:[%s209 + $0x18] sm:$0xff]
      %v227 = vld [vmem:[%s209 + $0x20] sm:$0xff]
      %v228 = vld [vmem:[%s209 + $0x28] sm:$0xff]
      %v229 = vld [vmem:[%s209 + $0x30] sm:$0xff]
      %v230 = vld [vmem:[%s209 + $0x38] sm:$0xff]
      %v231 = vld [vmem:[%s209 + $0x40] sm:$0xff]
      %v232 = vld [vmem:[%s209 + $0x48] sm:$0xff]
      %v233 = vld [vmem:[%s209 + $0x50] sm:$0xff]
      %v234 = vld [vmem:[%s209 + $0x58] sm:$0xff]
      %v235 = vld [vmem:[%s209 + $0x60] sm:$0xff]
      %v236 = vld [vmem:[%s209 + $0x68] sm:$0xff]
      %v237 = vld [vmem:[%s209 + $0x70] sm:$0xff]
      %v238 = vld [vmem:[%s209 + $0x78] sm:$0xff]
      %v239 = vld [vmem:[%s209 + $0x80] sm:$0xff]
      %v240 = vld [vmem:[%s209 + $0x88] sm:$0xff]
      %v241 = vld [vmem:[%s209 + $0x90] sm:$0xff]
      %v242 = vld [vmem:[%s209 + $0x98] sm:$0xff]
      %v243 = vld [vmem:[%s209 + $0xa0] sm:$0xff]
      %v244 = vld [vmem:[%s209 + $0xa8] sm:$0xff]
      %v245 = vld [vmem:[%s209 + $0xb0] sm:$0xff]
      %v246 = vld [vmem:[%s209 + $0xb8] sm:$0xff]
      %v247 = vld [vmem:[%s209 + $0xc0] sm:$0xff]
      %v248 = vld [vmem:[%s209 + $0xc8] sm:$0xff]
      %v249 = vld [vmem:[%s209 + $0xd0] sm:$0xff]
      %v250 = vld [vmem:[%s209 + $0xd8] sm:$0xff]
      %v251 = vld [vmem:[%s209 + $0xe0] sm:$0xff]
      %v252 = vld [vmem:[%s209 + $0xe8] sm:$0xff]
      %v253 = vld [vmem:[%s209 + $0xf0] sm:$0xff]
      %v254 = vld [vmem:[%s209 + $0xf8] sm:$0xff]
      %v255 = vld [vmem:[%s2] sm:$0x1]
      %v257 = vperm.slane %v255, 0
      %v259 = vmul.f32 %v223, %v257
      %v260 = vmul.f32 %v224, %v257
      %v261 = vmul.f32 %v225, %v257
      %v262 = vmul.f32 %v226, %v257
      %v263 = vmul.f32 %v227, %v257
      %v264 = vmul.f32 %v228, %v257
      %v265 = vmul.f32 %v229, %v257
      %v266 = vmul.f32 %v230, %v257
      %v267 = vmul.f32 %v231, %v257
      %v268 = vmul.f32 %v232, %v257
      %v269 = vmul.f32 %v233, %v257
      %v270 = vmul.f32 %v234, %v257
      %v271 = vmul.f32 %v235, %v257
      %v272 = vmul.f32 %v236, %v257
      %v273 = vmul.f32 %v237, %v257
      %v274 = vmul.f32 %v238, %v257
      %v275 = vmul.f32 %v239, %v257
      %v276 = vmul.f32 %v240, %v257
      %v277 = vmul.f32 %v241, %v257
      %v278 = vmul.f32 %v242, %v257
      %v279 = vmul.f32 %v243, %v257
      %v280 = vmul.f32 %v244, %v257
      %v281 = vmul.f32 %v245, %v257
      %v282 = vmul.f32 %v246, %v257
      %v283 = vmul.f32 %v247, %v257
      %v284 = vmul.f32 %v248, %v257
      %v285 = vmul.f32 %v249, %v257
      %v286 = vmul.f32 %v250, %v257
      %v287 = vmul.f32 %v251, %v257
      %v288 = vmul.f32 %v252, %v257
      %v289 = vmul.f32 %v253, %v257
      %v290 = vmul.f32 %v254, %v257
      %v291 = vld [vmem:[%s3] sm:$0x1]
      %v293 = vperm.slane %v291, 0
      %v295 = vadd.f32 %v259, %v293
      %v296 = vadd.f32 %v260, %v293
      %v297 = vadd.f32 %v261, %v293
      %v298 = vadd.f32 %v262, %v293
      %v299 = vadd.f32 %v263, %v293
      %v300 = vadd.f32 %v264, %v293
      %v301 = vadd.f32 %v265, %v293
      %v302 = vadd.f32 %v266, %v293
      %v303 = vadd.f32 %v267, %v293
      %v304 = vadd.f32 %v268, %v293
      %v305 = vadd.f32 %v269, %v293
      %v306 = vadd.f32 %v270, %v293
      %v307 = vadd.f32 %v271, %v293
      %v308 = vadd.f32 %v272, %v293
      %v309 = vadd.f32 %v273, %v293
      %v310 = vadd.f32 %v274, %v293
      %v311 = vadd.f32 %v275, %v293
      %v312 = vadd.f32 %v276, %v293
      %v313 = vadd.f32 %v277, %v293
      %v314 = vadd.f32 %v278, %v293
      %v315 = vadd.f32 %v279, %v293
      %v316 = vadd.f32 %v280, %v293
      %v317 = vadd.f32 %v281, %v293
      %v318 = vadd.f32 %v282, %v293
      %v319 = vadd.f32 %v283, %v293
      %v320 = vadd.f32 %v284, %v293
      %v321 = vadd.f32 %v285, %v293
      %v322 = vadd.f32 %v286, %v293
      %v323 = vadd.f32 %v287, %v293
      %v324 = vadd.f32 %v288, %v293
      %v325 = vadd.f32 %v289, %v293
      %v326 = vadd.f32 %v290, %v293
      %v327 = vld [vmem:[%s215] sm:$0xff]
      %v328 = vld [vmem:[%s215 + $0x8] sm:$0xff]
      %v329 = vld [vmem:[%s215 + $0x10] sm:$0xff]
      %v330 = vld [vmem:[%s215 + $0x18] sm:$0xff]
      %v331 = vld [vmem:[%s215 + $0x20] sm:$0xff]
      %v332 = vld [vmem:[%s215 + $0x28] sm:$0xff]
      %v333 = vld [vmem:[%s215 + $0x30] sm:$0xff]
      %v334 = vld [vmem:[%s215 + $0x38] sm:$0xff]
      %v335 = vld [vmem:[%s215 + $0x40] sm:$0xff]
      %v336 = vld [vmem:[%s215 + $0x48] sm:$0xff]
      %v337 = vld [vmem:[%s215 + $0x50] sm:$0xff]
      %v338 = vld [vmem:[%s215 + $0x58] sm:$0xff]
      %v339 = vld [vmem:[%s215 + $0x60] sm:$0xff]
      %v340 = vld [vmem:[%s215 + $0x68] sm:$0xff]
      %v341 = vld [vmem:[%s215 + $0x70] sm:$0xff]
      %v342 = vld [vmem:[%s215 + $0x78] sm:$0xff]
      %v343 = vld [vmem:[%s215 + $0x80] sm:$0xff]
      %v344 = vld [vmem:[%s215 + $0x88] sm:$0xff]
      %v345 = vld [vmem:[%s215 + $0x90] sm:$0xff]
      %v346 = vld [vmem:[%s215 + $0x98] sm:$0xff]
      %v347 = vld [vmem:[%s215 + $0xa0] sm:$0xff]
      %v348 = vld [vmem:[%s215 + $0xa8] sm:$0xff]
      %v349 = vld [vmem:[%s215 + $0xb0] sm:$0xff]
      %v350 = vld [vmem:[%s215 + $0xb8] sm:$0xff]
      %v351 = vld [vmem:[%s215 + $0xc0] sm:$0xff]
      %v352 = vld [vmem:[%s215 + $0xc8] sm:$0xff]
      %v353 = vld [vmem:[%s215 + $0xd0] sm:$0xff]
      %v354 = vld [vmem:[%s215 + $0xd8] sm:$0xff]
      %v355 = vld [vmem:[%s215 + $0xe0] sm:$0xff]
      %v356 = vld [vmem:[%s215 + $0xe8] sm:$0xff]
      %v357 = vld [vmem:[%s215 + $0xf0] sm:$0xff]
      %v358 = vld [vmem:[%s215 + $0xf8] sm:$0xff]
      %v359 = vadd.f32 %v295, %v327
      %v360 = vadd.f32 %v296, %v328
      %v361 = vadd.f32 %v297, %v329
      %v362 = vadd.f32 %v298, %v330
      %v363 = vadd.f32 %v299, %v331
      %v364 = vadd.f32 %v300, %v332
      %v365 = vadd.f32 %v301, %v333
      %v366 = vadd.f32 %v302, %v334
      %v367 = vadd.f32 %v303, %v335
      %v368 = vadd.f32 %v304, %v336
      %v369 = vadd.f32 %v305, %v337
      %v370 = vadd.f32 %v306, %v338
      %v371 = vadd.f32 %v307, %v339
      %v372 = vadd.f32 %v308, %v340
      %v373 = vadd.f32 %v309, %v341
      %v374 = vadd.f32 %v310, %v342
      %v375 = vadd.f32 %v311, %v343
      %v376 = vadd.f32 %v312, %v344
      %v377 = vadd.f32 %v313, %v345
      %v378 = vadd.f32 %v314, %v346
      %v379 = vadd.f32 %v315, %v347
      %v380 = vadd.f32 %v316, %v348
      %v381 = vadd.f32 %v317, %v349
      %v382 = vadd.f32 %v318, %v350
      %v383 = vadd.f32 %v319, %v351
      %v384 = vadd.f32 %v320, %v352
      %v385 = vadd.f32 %v321, %v353
      %v386 = vadd.f32 %v322, %v354
      %v387 = vadd.f32 %v323, %v355
      %v388 = vadd.f32 %v324, %v356
      %v389 = vadd.f32 %v325, %v357
      %v390 = vadd.f32 %v326, %v358
      %v391 = vmax.f32 %v359, 0.0
      %v392 = vmax.f32 %v360, 0.0
      %v393 = vmax.f32 %v361, 0.0
      %v394 = vmax.f32 %v362, 0.0
      %v395 = vmax.f32 %v363, 0.0
      %v396 = vmax.f32 %v364, 0.0
      %v397 = vmax.f32 %v365, 0.0
      %v398 = vmax.f32 %v366, 0.0
      %v399 = vmax.f32 %v367, 0.0
      %v400 = vmax.f32 %v368, 0.0
      %v401 = vmax.f32 %v369, 0.0
      %v402 = vmax.f32 %v370, 0.0
      %v403 = vmax.f32 %v371, 0.0
      %v404 = vmax.f32 %v372, 0.0
      %v405 = vmax.f32 %v373, 0.0
      %v406 = vmax.f32 %v374, 0.0
      %v407 = vmax.f32 %v375, 0.0
      %v408 = vmax.f32 %v376, 0.0
      %v409 = vmax.f32 %v377, 0.0
      %v410 = vmax.f32 %v378, 0.0
      %v411 = vmax.f32 %v379, 0.0
      %v412 = vmax.f32 %v380, 0.0
      %v413 = vmax.f32 %v381, 0.0
      %v414 = vmax.f32 %v382, 0.0
      %v415 = vmax.f32 %v383, 0.0
      %v416 = vmax.f32 %v384, 0.0
      %v417 = vmax.f32 %v385, 0.0
      %v418 = vmax.f32 %v386, 0.0
      %v419 = vmax.f32 %v387, 0.0
      %v420 = vmax.f32 %v388, 0.0
      %v421 = vmax.f32 %v389, 0.0
      %v422 = vmax.f32 %v390, 0.0
      %423 = vst [vmem:[%s221] sm:$0xff] %v391
      %424 = vst [vmem:[%s221 + $0x8] sm:$0xff] %v392
      %425 = vst [vmem:[%s221 + $0x10] sm:$0xff] %v393
      %426 = vst [vmem:[%s221 + $0x18] sm:$0xff] %v394
      %427 = vst [vmem:[%s221 + $0x20] sm:$0xff] %v395
      %428 = vst [vmem:[%s221 + $0x28] sm:$0xff] %v396
      %429 = vst [vmem:[%s221 + $0x30] sm:$0xff] %v397
      %430 = vst [vmem:[%s221 + $0x38] sm:$0xff] %v398
      %431 = vst [vmem:[%s221 + $0x40] sm:$0xff] %v399
      %432 = vst [vmem:[%s221 + $0x48] sm:$0xff] %v400
      %433 = vst [vmem:[%s221 + $0x50] sm:$0xff] %v401
      %434 = vst [vmem:[%s221 + $0x58] sm:$0xff] %v402
      %435 = vst [vmem:[%s221 + $0x60] sm:$0xff] %v403
      %436 = vst [vmem:[%s221 + $0x68] sm:$0xff] %v404
      %437 = vst [vmem:[%s221 + $0x70] sm:$0xff] %v405
      %438 = vst [vmem:[%s221 + $0x78] sm:$0xff] %v406
      %439 = vst [vmem:[%s221 + $0x80] sm:$0xff] %v407
      %440 = vst [vmem:[%s221 + $0x88] sm:$0xff] %v408
      %441 = vst [vmem:[%s221 + $0x90] sm:$0xff] %v409
      %442 = vst [vmem:[%s221 + $0x98] sm:$0xff] %v410
      %443 = vst [vmem:[%s221 + $0xa0] sm:$0xff] %v411
      %444 = vst [vmem:[%s221 + $0xa8] sm:$0xff] %v412
      %445 = vst [vmem:[%s221 + $0xb0] sm:$0xff] %v413
      %446 = vst [vmem:[%s221 + $0xb8] sm:$0xff] %v414
      %447 = vst [vmem:[%s221 + $0xc0] sm:$0xff] %v415
      %448 = vst [vmem:[%s221 + $0xc8] sm:$0xff] %v416
      %449 = vst [vmem:[%s221 + $0xd0] sm:$0xff] %v417
      %450 = vst [vmem:[%s221 + $0xd8] sm:$0xff] %v418
      %451 = vst [vmem:[%s221 + $0xe0] sm:$0xff] %v419
      %452 = vst [vmem:[%s221 + $0xe8] sm:$0xff] %v420
      %453 = vst [vmem:[%s221 + $0xf0] sm:$0xff] %v421
      %454 = vst [vmem:[%s221 + $0xf8] sm:$0xff] %v422
      %s455 = smul.u32 32, %s15
      %p456 = scmp.lt.s32.totalorder %s455, 63
      %s457 = scalar_select %p456, %s455, 63
      %s458 = smul.addr %s457, 8
      %s459 = scalar_lea.vmem %s4, %s458
      // Predicated region
      $region37: #{masked_resnet_forward.23} parent=35 // pred_check
        %p460 = pneg %p127
      $region38: #{masked_resnet_forward.23} parent=35 // pred_check_branch
        %462 = sbr.rel (%p460) target = $region40
      $region39: #{masked_resnet_forward.23} parent=35 // pred_region
        %s463 = smul.u32 32, %s15
      $region40: #{masked_resnet_forward.23} parent=35 // pred_fallthru
        _
    $region36: #{masked_resnet_forward.23} parent=5 // pred_fallthru
      _
    %p464 = scmp.le.s32.totalorder 2, %s10
    // Predicated region
    $region41: #{masked_resnet_forward.23} parent=5 // pred_check
      %p465 = pneg %p464
    $region42: #{masked_resnet_forward.23} parent=5 // pred_check_branch
      %467 = sbr.rel (%p465) target = $region44
    $region43: #{masked_resnet_forward.23} parent=5 // pred_region
      %s468 = ssub.s32 %s10, 2
      // Predicated region
      $region45: #{masked_resnet_forward.23} parent=43 // pred_check
        %p469 = pneg %p133
      $region46: #{masked_resnet_forward.23} parent=43 // pred_check_branch
        %471 = sbr.rel (%p469) target = $region48
      $region47: #{masked_resnet_forward.23} parent=43 // pred_region
        %s472 = smul.u32 32, %s16
        %p473 = scmp.lt.s32.totalorder %s472, 63
        %s474 = scalar_select %p473, %s472, 63
        %s475 = smul.addr %s474, 8
        %s476 = scalar_lea.vmem %s4, %s475
      $region48: #{masked_resnet_forward.23} parent=43 // pred_fallthru
        _
    $region44: #{masked_resnet_forward.23} parent=5 // pred_fallthru
      _
  $region6: #{masked_resnet_forward.23} parent=0 // loop_footer
    %s14 = sadd.s32 1, %s10
  $region7: #{masked_resnet_forward.23} parent=0 // loop_footer_branch
    %9 = sbr.rel target = $region3
  $region8: #{masked_resnet_forward.23} parent=0 // loop_exit
    _

</llo_original>
